<compile_context>
chip_gen: v7x
topology: tpu7x:2x2x1
jax: 0.10.0
libtpu: 0.0.40
codegen_flags: <defaults>
</compile_context>

<pallas_src>
import functools

import jax
import jax.numpy as jnp
from jax.experimental import pallas as pl
from jax.experimental.pallas import tpu as pltpu


def _mlp_kernel(x_ref, w1_ref, b1_ref, w2_ref, b2_ref, w3_ref, b3_ref, o_ref):
    # x tile: (TB, latent) bf16; weights bf16 (resident); biases f32 (resident).
    x = x_ref[...]

    # Layer 1: Linear + ReLU  (MXU bf16 -> f32 acc, VPU epilogue in f32)
    h = jnp.dot(x, w1_ref[...], preferred_element_type=jnp.float32) + b1_ref[...]
    h = jnp.maximum(h, 0.0).astype(jnp.bfloat16)

    # Layer 2: Linear + ReLU
    h = jnp.dot(h, w2_ref[...], preferred_element_type=jnp.float32) + b2_ref[...]
    h = jnp.maximum(h, 0.0).astype(jnp.bfloat16)

    # Layer 3: Linear (property head, output columns padded to lane-dense 128)
    y = jnp.dot(h, w3_ref[...], preferred_element_type=jnp.float32) + b3_ref[...]
    o_ref[...] = y  # f32, unmasked full-lane store


def _round_up(n, m):
    return ((n + m - 1) // m) * m


@functools.partial(jax.jit, static_argnames=("tile_batch",))
def property_predictor_forward(x, params, *, tile_batch=512):
    """Pallas-fused equivalent of PropertyPredictorOptuna.forward(x).

    x:      [batch, latent_dimension] float32
    params: (w1 [latent,hidden], b1 [1,hidden],
             w2 [hidden,hidden], b2 [1,hidden],
             w3 [hidden,prop],   b3 [1,prop])   -- [in, out] layout.
    """
    w1, b1, w2, b2, w3, b3 = params
    batch, latent = x.shape
    hidden = w1.shape[1]
    prop_dim = w3.shape[1]

    # --- lane-dense padding of resident dimensions ---------------------------
    hidden_p = _round_up(max(hidden, 128), 128)       # hidden -> multiple of 128
    out_cols = _round_up(max(prop_dim, 128), 128)     # property head -> >=128

    w1p = jnp.zeros((latent, hidden_p), w1.dtype).at[:, :hidden].set(w1)
    b1p = jnp.zeros((1, hidden_p), b1.dtype).at[:, :hidden].set(b1)
    w2p = jnp.zeros((hidden_p, hidden_p), w2.dtype).at[:hidden, :hidden].set(w2)
    b2p = jnp.zeros((1, hidden_p), b2.dtype).at[:, :hidden].set(b2)
    w3p = jnp.zeros((hidden_p, out_cols), w3.dtype).at[:hidden, :prop_dim].set(w3)
    b3p = jnp.zeros((1, out_cols), b3.dtype).at[:, :prop_dim].set(b3)

    # --- bf16 MXU operands; biases stay f32 for the VPU epilogue -------------
    xb = x.astype(jnp.bfloat16)
    w1b = w1p.astype(jnp.bfloat16)
    w2b = w2p.astype(jnp.bfloat16)
    w3b = w3p.astype(jnp.bfloat16)
    b1f = b1p.astype(jnp.float32)
    b2f = b2p.astype(jnp.float32)
    b3f = b3p.astype(jnp.float32)

    # --- batch tiling (pad rows so the grid divides evenly) ------------------
    tb = min(tile_batch, _round_up(batch, 8))
    tb = max(8, (tb // 8) * 8)
    padded_batch = pl.cdiv(batch, tb) * tb
    if padded_batch != batch:
        xb = jnp.pad(xb, ((0, padded_batch - batch), (0, 0)))
    grid = (padded_batch // tb,)

    # Only x / out move per grid step; weights & biases are resident in VMEM.
    x_spec = pl.BlockSpec((tb, latent), lambda i: (i, 0))
    w1_spec = pl.BlockSpec((latent, hidden_p), lambda i: (0, 0))
    b1_spec = pl.BlockSpec((1, hidden_p), lambda i: (0, 0))
    w2_spec = pl.BlockSpec((hidden_p, hidden_p), lambda i: (0, 0))
    b2_spec = pl.BlockSpec((1, hidden_p), lambda i: (0, 0))
    w3_spec = pl.BlockSpec((hidden_p, out_cols), lambda i: (0, 0))
    b3_spec = pl.BlockSpec((1, out_cols), lambda i: (0, 0))
    out_spec = pl.BlockSpec((tb, out_cols), lambda i: (i, 0))

    flops = 2 * padded_batch * (
        latent * hidden_p + hidden_p * hidden_p + hidden_p * out_cols
    )
    bytes_accessed = (
        xb.size * 2                                   # bf16 x
        + (w1b.size + w2b.size + w3b.size) * 2        # bf16 weights (one-time)
        + (b1f.size + b2f.size + b3f.size) * 4        # f32 biases (one-time)
        + padded_batch * out_cols * 4                 # f32 output
    )

    y_padded = pl.pallas_call(
        _mlp_kernel,
        out_shape=jax.ShapeDtypeStruct((padded_batch, out_cols), jnp.float32),
        grid=grid,
        in_specs=[x_spec, w1_spec, b1_spec, w2_spec, b2_spec, w3_spec, b3_spec],
        out_specs=out_spec,
        compiler_params=pltpu.CompilerParams(
            dimension_semantics=("parallel",),        # shard batch across TCs on v7x
            vmem_limit_bytes=32 * 1024 * 1024,        # safe on v7x's 64 MiB VMEM
        ),
        cost_estimate=pl.CostEstimate(
            flops=flops, transcendentals=0, bytes_accessed=bytes_accessed
        ),
    )(xb, w1b, b1f, w2b, b2f, w3b, b3f)

    # Strip batch padding and the lane-padding of the property head.
    return y_padded[:batch, :prop_dim]


def init_params(key, latent_dim, hidden_dim, property_dim):
    """Deterministic synthetic parameters in [in, out] layout."""
    ks = jax.random.split(key, 6)
    w1 = jax.random.normal(ks[0], (latent_dim, hidden_dim), jnp.float32) / jnp.sqrt(latent_dim)
    b1 = jax.random.normal(ks[1], (1, hidden_dim), jnp.float32) * 0.01
    w2 = jax.random.normal(ks[2], (hidden_dim, hidden_dim), jnp.float32) / jnp.sqrt(hidden_dim)
    b2 = jax.random.normal(ks[3], (1, hidden_dim), jnp.float32) * 0.01
    w3 = jax.random.normal(ks[4], (hidden_dim, property_dim), jnp.float32) / jnp.sqrt(hidden_dim)
    b3 = jax.random.normal(ks[5], (1, property_dim), jnp.float32) * 0.01
    return (w1, b1, w2, b2, w3, b3)


def _reference_forward(x, params):
    """Pure-JAX reference with the same bf16-operand / f32-accumulate recipe."""
    w1, b1, w2, b2, w3, b3 = params
    h = jnp.dot(x.astype(jnp.bfloat16), w1.astype(jnp.bfloat16),
                preferred_element_type=jnp.float32) + b1
    h = jnp.maximum(h, 0.0).astype(jnp.bfloat16)
    h = jnp.dot(h, w2.astype(jnp.bfloat16),
                preferred_element_type=jnp.float32) + b2
    h = jnp.maximum(h, 0.0).astype(jnp.bfloat16)
    return jnp.dot(h, w3.astype(jnp.bfloat16),
                   preferred_element_type=jnp.float32) + b3


if __name__ == "__main__":
    # Shapes consistent with the module: latent=32, hidden=64, property_dim=4.
    # Batch large enough to exercise the batch grid (2 steps at TB=512).
    batch, latent_dim, hidden_dim, property_dim = 1024, 32, 64, 4

    key = jax.random.PRNGKey(0)
    k_x, k_p = jax.random.split(key)
    x = jax.random.normal(k_x, (batch, latent_dim), jnp.float32)
    params = init_params(k_p, latent_dim, hidden_dim, property_dim)

    y = property_predictor_forward(x, params, tile_batch=512)
    y = jax.block_until_ready(y)

    y_ref = _reference_forward(x, params)
    assert y.shape == (batch, property_dim)
    assert jnp.allclose(y, y_ref, atol=2e-3, rtol=2e-3), (
        float(jnp.max(jnp.abs(y - y_ref)))
    )

    print("KERNEL_OK")
</pallas_src>

<mosaic_0001>
module attributes {stable_mosaic.version = 11 : i64} {
  func.func @_mlp_kernel(%arg0: i32, %arg1: memref<512x32xbf16, #tpu.memory_space<vmem>>, %arg2: memref<32x128xbf16, #tpu.memory_space<vmem>>, %arg3: memref<1x128xf32, #tpu.memory_space<vmem>>, %arg4: memref<128x128xbf16, #tpu.memory_space<vmem>>, %arg5: memref<1x128xf32, #tpu.memory_space<vmem>>, %arg6: memref<128x128xbf16, #tpu.memory_space<vmem>>, %arg7: memref<1x128xf32, #tpu.memory_space<vmem>>, %arg8: memref<512x128xf32, #tpu.memory_space<vmem>>) attributes {dimension_semantics = [#tpu.dimension_semantics<parallel>], iteration_bounds = array<i64: 2>, scalar_prefetch = 0 : i64, scratch_operands = 0 : i64, tpu.core_type = #tpu.core_type<tc>, window_params = [{transform_indices = @transform_0, window_bounds = array<i64: 512, 32>}, {pipeline_mode = #tpu.pipeline_mode<synchronous>, transform_indices = @transform_1, window_bounds = array<i64: 32, 128>}, {pipeline_mode = #tpu.pipeline_mode<synchronous>, transform_indices = @transform_2, window_bounds = array<i64: 1, 128>}, {pipeline_mode = #tpu.pipeline_mode<synchronous>, transform_indices = @transform_3, window_bounds = array<i64: 128, 128>}, {pipeline_mode = #tpu.pipeline_mode<synchronous>, transform_indices = @transform_4, window_bounds = array<i64: 1, 128>}, {pipeline_mode = #tpu.pipeline_mode<synchronous>, transform_indices = @transform_5, window_bounds = array<i64: 128, 128>}, {pipeline_mode = #tpu.pipeline_mode<synchronous>, transform_indices = @transform_6, window_bounds = array<i64: 1, 128>}, {transform_indices = @transform_7, window_bounds = array<i64: 512, 128>}]} {
    %c0 = arith.constant 0 : index
    %c0_0 = arith.constant 0 : index
    %0 = vector.load %arg1[%c0, %c0_0] : memref<512x32xbf16, #tpu.memory_space<vmem>>, vector<512x32xbf16>
    %c0_1 = arith.constant 0 : index
    %c0_2 = arith.constant 0 : index
    %1 = vector.load %arg2[%c0_1, %c0_2] : memref<32x128xbf16, #tpu.memory_space<vmem>>, vector<32x128xbf16>
    %cst = arith.constant dense<0.000000e+00> : vector<512x128xf32>
    %2 = tpu.matmul %0, %1, %cst {dimension_numbers = #tpu.dot_dimension_numbers<[1], [0], [0], [1], [0, 0, 1, 1], [], []>} : vector<512x32xbf16>, vector<32x128xbf16>, vector<512x128xf32> -> vector<512x128xf32>
    %c0_3 = arith.constant 0 : index
    %c0_4 = arith.constant 0 : index
    %3 = vector.load %arg3[%c0_3, %c0_4] : memref<1x128xf32, #tpu.memory_space<vmem>>, vector<1x128xf32>
    %4 = vector.broadcast %3 : vector<1x128xf32> to vector<512x128xf32>
    %5 = arith.addf %2, %4 : vector<512x128xf32>
    %cst_5 = arith.constant 0.000000e+00 : f32
    %6 = vector.broadcast %cst_5 : f32 to vector<512x128xf32>
    %7 = arith.maximumf %5, %6 : vector<512x128xf32>
    %8 = arith.truncf %7 : vector<512x128xf32> to vector<512x128xbf16>
    %c0_6 = arith.constant 0 : index
    %c0_7 = arith.constant 0 : index
    %9 = vector.load %arg4[%c0_6, %c0_7] : memref<128x128xbf16, #tpu.memory_space<vmem>>, vector<128x128xbf16>
    %cst_8 = arith.constant dense<0.000000e+00> : vector<512x128xf32>
    %10 = tpu.matmul %8, %9, %cst_8 {dimension_numbers = #tpu.dot_dimension_numbers<[1], [0], [0], [1], [0, 0, 1, 1], [], []>} : vector<512x128xbf16>, vector<128x128xbf16>, vector<512x128xf32> -> vector<512x128xf32>
    %c0_9 = arith.constant 0 : index
    %c0_10 = arith.constant 0 : index
    %11 = vector.load %arg5[%c0_9, %c0_10] : memref<1x128xf32, #tpu.memory_space<vmem>>, vector<1x128xf32>
    %12 = vector.broadcast %11 : vector<1x128xf32> to vector<512x128xf32>
    %13 = arith.addf %10, %12 : vector<512x128xf32>
    %cst_11 = arith.constant 0.000000e+00 : f32
    %14 = vector.broadcast %cst_11 : f32 to vector<512x128xf32>
    %15 = arith.maximumf %13, %14 : vector<512x128xf32>
    %16 = arith.truncf %15 : vector<512x128xf32> to vector<512x128xbf16>
    %c0_12 = arith.constant 0 : index
    %c0_13 = arith.constant 0 : index
    %17 = vector.load %arg6[%c0_12, %c0_13] : memref<128x128xbf16, #tpu.memory_space<vmem>>, vector<128x128xbf16>
    %cst_14 = arith.constant dense<0.000000e+00> : vector<512x128xf32>
    %18 = tpu.matmul %16, %17, %cst_14 {dimension_numbers = #tpu.dot_dimension_numbers<[1], [0], [0], [1], [0, 0, 1, 1], [], []>} : vector<512x128xbf16>, vector<128x128xbf16>, vector<512x128xf32> -> vector<512x128xf32>
    %c0_15 = arith.constant 0 : index
    %c0_16 = arith.constant 0 : index
    %19 = vector.load %arg7[%c0_15, %c0_16] : memref<1x128xf32, #tpu.memory_space<vmem>>, vector<1x128xf32>
    %20 = vector.broadcast %19 : vector<1x128xf32> to vector<512x128xf32>
    %21 = arith.addf %18, %20 : vector<512x128xf32>
    %c0_17 = arith.constant 0 : index
    %c0_18 = arith.constant 0 : index
    %22 = vector.load %arg8[%c0_17, %c0_18] : memref<512x128xf32, #tpu.memory_space<vmem>>, vector<512x128xf32>
    tpu.vector_store %arg8[%c0_17, %c0_18], %21 {strides = array<i32>} : memref<512x128xf32, #tpu.memory_space<vmem>>, vector<512x128xf32>,
    return
  }
  func.func @transform_0(%arg0: i32) -> (i32, i32) {
    %c0_i32 = arith.constant 0 : i32
    %c0_i32_0 = arith.constant 0 : i32
    return %arg0, %c0_i32 : i32, i32
  }
  func.func @transform_1(%arg0: i32) -> (i32, i32) {
    %c0_i32 = arith.constant 0 : i32
    %c0_i32_0 = arith.constant 0 : i32
    %c0_i32_1 = arith.constant 0 : i32
    return %c0_i32, %c0_i32_0 : i32, i32
  }
  func.func @transform_2(%arg0: i32) -> (i32, i32) {
    %c0_i32 = arith.constant 0 : i32
    %c0_i32_0 = arith.constant 0 : i32
    %c0_i32_1 = arith.constant 0 : i32
    return %c0_i32, %c0_i32_0 : i32, i32
  }
  func.func @transform_3(%arg0: i32) -> (i32, i32) {
    %c0_i32 = arith.constant 0 : i32
    %c0_i32_0 = arith.constant 0 : i32
    %c0_i32_1 = arith.constant 0 : i32
    return %c0_i32, %c0_i32_0 : i32, i32
  }
  func.func @transform_4(%arg0: i32) -> (i32, i32) {
    %c0_i32 = arith.constant 0 : i32
    %c0_i32_0 = arith.constant 0 : i32
    %c0_i32_1 = arith.constant 0 : i32
    return %c0_i32, %c0_i32_0 : i32, i32
  }
  func.func @transform_5(%arg0: i32) -> (i32, i32) {
    %c0_i32 = arith.constant 0 : i32
    %c0_i32_0 = arith.constant 0 : i32
    %c0_i32_1 = arith.constant 0 : i32
    return %c0_i32, %c0_i32_0 : i32, i32
  }
  func.func @transform_6(%arg0: i32) -> (i32, i32) {
    %c0_i32 = arith.constant 0 : i32
    %c0_i32_0 = arith.constant 0 : i32
    %c0_i32_1 = arith.constant 0 : i32
    return %c0_i32, %c0_i32_0 : i32, i32
  }
  func.func @transform_7(%arg0: i32) -> (i32, i32) {
    %c0_i32 = arith.constant 0 : i32
    %c0_i32_0 = arith.constant 0 : i32
    return %arg0, %c0_i32 : i32, i32
  }
}

</mosaic_0001>

<llo_original>
// kernel: property_predictor_forward.1
$region0: #{property_predictor_forward.1}
  #allocation0 [shape = 'u32[]', space=smem, size = 0x4, offset = 0x4, fixed_abs, tag = 'smem constant byte address 0x4 - core index']
  #allocation1 [shape = 'u32[144,128]{1,0:T(1,128)}', space=vmem, size = 0x12000, scoped, tag = 'internal scratch']
  %s0 = inlined_call_operand.vmem [shape: bf16[1024,32], index: 0, kind: input, shape index: {}]
  %s1 = inlined_call_operand.vmem [shape: bf16[32,128], index: 1, kind: input, shape index: {}]
  %s2 = inlined_call_operand.vmem [shape: f32[1,128], index: 2, kind: input, shape index: {}]
  %s3 = inlined_call_operand.vmem [shape: bf16[128,128], index: 3, kind: input, shape index: {}]
  %s4 = inlined_call_operand.vmem [shape: f32[1,128], index: 4, kind: input, shape index: {}]
  %s5 = inlined_call_operand.vmem [shape: bf16[128,128], index: 5, kind: input, shape index: {}]
  %s6 = inlined_call_operand.vmem [shape: f32[1,128], index: 6, kind: input, shape index: {}]
  %s7 = inlined_call_operand.vmem [shape: f32[1024,128], index: 7, kind: output, shape index: {}]
  %s8 = sld [smem:[#allocation0]]
  $region61: #{property_predictor_forward.1} parent=0
    _
  %s10 = ssub.s32 1, %s8
  %s11 = scalar_select 0, %s10, %s8
  loop: start=0, step=1, limit=4
  $region2: #{property_predictor_forward.1} parent=0 // loop_pre_header
    _
  $region3: #{property_predictor_forward.1} parent=0 // loop_header
    %s13 = sphi 0, %s17
    %p14 = scmp.ge.s32.totalorder %s13, 4
    %s23 = sphi 0, %s25
    %s26 = sphi 0, %s23
    %s27 = sphi 0, %s26
    %s43 = sphi 0, %s27
    %s47 = sphi 0, %s47
    %s49 = sphi 0, %s47
    %s50 = sphi 0, %s49
    %s64 = sphi 0, %s50
    %s68 = sphi 0, %s68
    %s70 = sphi 0, %s68
    %s71 = sphi 0, %s70
    %s85 = sphi 0, %s71
    %s89 = sphi 0, %s89
    %s91 = sphi 0, %s89
    %s92 = sphi 0, %s91
    %s106 = sphi 0, %s92
    %s110 = sphi 0, %s110
    %s112 = sphi 0, %s110
    %s113 = sphi 0, %s112
    %s127 = sphi 0, %s113
    %s131 = sphi 0, %s131
    %s133 = sphi 0, %s131
    %s134 = sphi 0, %s133
    %s148 = sphi 0, %s134
    %s152 = sphi 0, %s152
    %s154 = sphi 0, %s152
    %s155 = sphi 0, %s154
    %s169 = sphi 0, %s155
    %s175 = sphi 0, %s177
    %s178 = sphi 0, %s175
    %s179 = sphi 0, %s178
    %s195 = sphi 0, %s179
  $region4: #{property_predictor_forward.1} parent=0 // loop_header_branch
    %16 = sbr.rel (%p14) target = $region8
  $region5: #{property_predictor_forward.1} parent=0 // loop_body
    %s18 = ssub.s32 %s13, 1
    %s19 = ssub.s32 %s13, 2
    %s20 = sadd.s32 %s13, 1
    %s21 = ssub.s32 %s13, %s20
    %p22 = scmp.eq.s32.totalorder %s21, 0
    %s24 = sadd.s32 %s23, 1
    %s25 = scalar_select %p22, %s23, %s24
    %p28 = pneg %p22
    %p29 = scmp.eq.s32.totalorder %s13, 1
    %p30 = por %p28, %p29
    %p31 = scmp.ne.s32.totalorder %s23, %s26
    %p32 = scmp.eq.s32.totalorder %s13, 0
    %p33 = por %p31, %p32
    %p34 = scmp.ne.s32.totalorder %s23, %s26
    %p35 = scmp.eq.s32.totalorder %s18, 1
    %p36 = por %p34, %p35
    %p37 = scmp.ne.s32.totalorder %s26, %s27
    %p38 = scmp.eq.s32.totalorder %s18, 0
    %p39 = por %p37, %p38
    %p40 = scmp.ne.s32.totalorder %s26, %s27
    %p41 = scmp.eq.s32.totalorder %s19, 1
    %p42 = por %p40, %p41
    %p44 = scmp.ne.s32.totalorder %s27, %s43
    %p45 = scmp.eq.s32.totalorder %s19, 0
    %p46 = por %p44, %p45
    %s48 = sadd.s32 %s47, 1
    %p51 = scmp.eq.s32.totalorder %s13, 1
    %p52 = scmp.ne.s32.totalorder %s47, %s49
    %p53 = scmp.eq.s32.totalorder %s13, 0
    %p54 = por %p52, %p53
    %p55 = scmp.ne.s32.totalorder %s47, %s49
    %p56 = scmp.eq.s32.totalorder %s18, 1
    %p57 = por %p55, %p56
    %p58 = scmp.ne.s32.totalorder %s49, %s50
    %p59 = scmp.eq.s32.totalorder %s18, 0
    %p60 = por %p58, %p59
    %p61 = scmp.ne.s32.totalorder %s49, %s50
    %p62 = scmp.eq.s32.totalorder %s19, 1
    %p63 = por %p61, %p62
    %p65 = scmp.ne.s32.totalorder %s50, %s64
    %p66 = scmp.eq.s32.totalorder %s19, 0
    %p67 = por %p65, %p66
    %s69 = sadd.s32 %s68, 1
    %p72 = scmp.eq.s32.totalorder %s13, 1
    %p73 = scmp.ne.s32.totalorder %s68, %s70
    %p74 = scmp.eq.s32.totalorder %s13, 0
    %p75 = por %p73, %p74
    %p76 = scmp.ne.s32.totalorder %s68, %s70
    %p77 = scmp.eq.s32.totalorder %s18, 1
    %p78 = por %p76, %p77
    %p79 = scmp.ne.s32.totalorder %s70, %s71
    %p80 = scmp.eq.s32.totalorder %s18, 0
    %p81 = por %p79, %p80
    %p82 = scmp.ne.s32.totalorder %s70, %s71
    %p83 = scmp.eq.s32.totalorder %s19, 1
    %p84 = por %p82, %p83
    %p86 = scmp.ne.s32.totalorder %s71, %s85
    %p87 = scmp.eq.s32.totalorder %s19, 0
    %p88 = por %p86, %p87
    %s90 = sadd.s32 %s89, 1
    %p93 = scmp.eq.s32.totalorder %s13, 1
    %p94 = scmp.ne.s32.totalorder %s89, %s91
    %p95 = scmp.eq.s32.totalorder %s13, 0
    %p96 = por %p94, %p95
    %p97 = scmp.ne.s32.totalorder %s89, %s91
    %p98 = scmp.eq.s32.totalorder %s18, 1
    %p99 = por %p97, %p98
    %p100 = scmp.ne.s32.totalorder %s91, %s92
    %p101 = scmp.eq.s32.totalorder %s18, 0
    %p102 = por %p100, %p101
    %p103 = scmp.ne.s32.totalorder %s91, %s92
    %p104 = scmp.eq.s32.totalorder %s19, 1
    %p105 = por %p103, %p104
    %p107 = scmp.ne.s32.totalorder %s92, %s106
    %p108 = scmp.eq.s32.totalorder %s19, 0
    %p109 = por %p107, %p108
    %s111 = sadd.s32 %s110, 1
    %p114 = scmp.eq.s32.totalorder %s13, 1
    %p115 = scmp.ne.s32.totalorder %s110, %s112
    %p116 = scmp.eq.s32.totalorder %s13, 0
    %p117 = por %p115, %p116
    %p118 = scmp.ne.s32.totalorder %s110, %s112
    %p119 = scmp.eq.s32.totalorder %s18, 1
    %p120 = por %p118, %p119
    %p121 = scmp.ne.s32.totalorder %s112, %s113
    %p122 = scmp.eq.s32.totalorder %s18, 0
    %p123 = por %p121, %p122
    %p124 = scmp.ne.s32.totalorder %s112, %s113
    %p125 = scmp.eq.s32.totalorder %s19, 1
    %p126 = por %p124, %p125
    %p128 = scmp.ne.s32.totalorder %s113, %s127
    %p129 = scmp.eq.s32.totalorder %s19, 0
    %p130 = por %p128, %p129
    %s132 = sadd.s32 %s131, 1
    %p135 = scmp.eq.s32.totalorder %s13, 1
    %p136 = scmp.ne.s32.totalorder %s131, %s133
    %p137 = scmp.eq.s32.totalorder %s13, 0
    %p138 = por %p136, %p137
    %p139 = scmp.ne.s32.totalorder %s131, %s133
    %p140 = scmp.eq.s32.totalorder %s18, 1
    %p141 = por %p139, %p140
    %p142 = scmp.ne.s32.totalorder %s133, %s134
    %p143 = scmp.eq.s32.totalorder %s18, 0
    %p144 = por %p142, %p143
    %p145 = scmp.ne.s32.totalorder %s133, %s134
    %p146 = scmp.eq.s32.totalorder %s19, 1
    %p147 = por %p145, %p146
    %p149 = scmp.ne.s32.totalorder %s134, %s148
    %p150 = scmp.eq.s32.totalorder %s19, 0
    %p151 = por %p149, %p150
    %s153 = sadd.s32 %s152, 1
    %p156 = scmp.eq.s32.totalorder %s13, 1
    %p157 = scmp.ne.s32.totalorder %s152, %s154
    %p158 = scmp.eq.s32.totalorder %s13, 0
    %p159 = por %p157, %p158
    %p160 = scmp.ne.s32.totalorder %s152, %s154
    %p161 = scmp.eq.s32.totalorder %s18, 1
    %p162 = por %p160, %p161
    %p163 = scmp.ne.s32.totalorder %s154, %s155
    %p164 = scmp.eq.s32.totalorder %s18, 0
    %p165 = por %p163, %p164
    %p166 = scmp.ne.s32.totalorder %s154, %s155
    %p167 = scmp.eq.s32.totalorder %s19, 1
    %p168 = por %p166, %p167
    %p170 = scmp.ne.s32.totalorder %s155, %s169
    %p171 = scmp.eq.s32.totalorder %s19, 0
    %p172 = por %p170, %p171
    %s173 = ssub.s32 %s13, %s20
    %p174 = scmp.eq.s32.totalorder %s173, 0
    %s176 = sadd.s32 %s175, 1
    %s177 = scalar_select %p174, %s175, %s176
    %p180 = pneg %p174
    %p181 = scmp.eq.s32.totalorder %s13, 1
    %p182 = por %p180, %p181
    %p183 = scmp.ne.s32.totalorder %s175, %s178
    %p184 = scmp.eq.s32.totalorder %s13, 0
    %p185 = por %p183, %p184
    %p186 = scmp.ne.s32.totalorder %s175, %s178
    %p187 = scmp.eq.s32.totalorder %s18, 1
    %p188 = por %p186, %p187
    %p189 = scmp.ne.s32.totalorder %s178, %s179
    %p190 = scmp.eq.s32.totalorder %s18, 0
    %p191 = por %p189, %p190
    %p192 = scmp.ne.s32.totalorder %s178, %s179
    %p193 = scmp.eq.s32.totalorder %s19, 1
    %p194 = por %p192, %p193
    %p196 = scmp.ne.s32.totalorder %s179, %s195
    %p197 = scmp.eq.s32.totalorder %s19, 0
    %p198 = por %p196, %p197
    %p199 = scmp.le.s32.totalorder 1, %s13
    %p200 = scmp.lt.s32.totalorder %s13, 3
    %p201 = pnand %p199, %p200
    %p202 = pneg %p201
    // Predicated region
    $region9: #{property_predictor_forward.1} parent=5 // pred_check
      _
    $region10: #{property_predictor_forward.1} parent=5 // pred_check_branch
      %204 = sbr.rel (%p201) target = $region12
    $region11: #{property_predictor_forward.1} parent=5 // pred_region
      %s205 = ssub.s32 %s13, 1
      // Predicated region
      $region13: #{property_predictor_forward.1} parent=11 // pred_check
        %p206 = pneg %p60
      $region14: #{property_predictor_forward.1} parent=11 // pred_check_branch
        %208 = sbr.rel (%p206) target = $region16
      $region15: #{property_predictor_forward.1} parent=11 // pred_region
        _
      $region16: #{property_predictor_forward.1} parent=11 // pred_fallthru
        _
      // Predicated region
      $region17: #{property_predictor_forward.1} parent=11 // pred_check
        %p209 = pneg %p81
      $region18: #{property_predictor_forward.1} parent=11 // pred_check_branch
        %211 = sbr.rel (%p209) target = $region20
      $region19: #{property_predictor_forward.1} parent=11 // pred_region
        _
      $region20: #{property_predictor_forward.1} parent=11 // pred_fallthru
        _
      // Predicated region
      $region21: #{property_predictor_forward.1} parent=11 // pred_check
        %p212 = pneg %p102
      $region22: #{property_predictor_forward.1} parent=11 // pred_check_branch
        %214 = sbr.rel (%p212) target = $region24
      $region23: #{property_predictor_forward.1} parent=11 // pred_region
        _
      $region24: #{property_predictor_forward.1} parent=11 // pred_fallthru
        _
      // Predicated region
      $region25: #{property_predictor_forward.1} parent=11 // pred_check
        %p215 = pneg %p123
      $region26: #{property_predictor_forward.1} parent=11 // pred_check_branch
        %217 = sbr.rel (%p215) target = $region28
      $region27: #{property_predictor_forward.1} parent=11 // pred_region
        _
      $region28: #{property_predictor_forward.1} parent=11 // pred_fallthru
        _
      // Predicated region
      $region29: #{property_predictor_forward.1} parent=11 // pred_check
        %p218 = pneg %p144
      $region30: #{property_predictor_forward.1} parent=11 // pred_check_branch
        %220 = sbr.rel (%p218) target = $region32
      $region31: #{property_predictor_forward.1} parent=11 // pred_region
        _
      $region32: #{property_predictor_forward.1} parent=11 // pred_fallthru
        _
      // Predicated region
      $region33: #{property_predictor_forward.1} parent=11 // pred_check
        %p221 = pneg %p165
      $region34: #{property_predictor_forward.1} parent=11 // pred_check_branch
        %223 = sbr.rel (%p221) target = $region36
      $region35: #{property_predictor_forward.1} parent=11 // pred_region
        _
      $region36: #{property_predictor_forward.1} parent=11 // pred_fallthru
        _
    $region12: #{property_predictor_forward.1} parent=5 // pred_fallthru
      _
    %p224 = scmp.lt.s32.totalorder %s13, 2
    // Predicated region
    $region37: #{property_predictor_forward.1} parent=5 // pred_check
      %p225 = pneg %p224
    $region38: #{property_predictor_forward.1} parent=5 // pred_check_branch
      %227 = sbr.rel (%p225) target = $region40
    $region39: #{property_predictor_forward.1} parent=5 // pred_region
      // Predicated region
      $region41: #{property_predictor_forward.1} parent=39 // pred_check
        %p228 = pneg %p33
      $region42: #{property_predictor_forward.1} parent=39 // pred_check_branch
        %230 = sbr.rel (%p228) target = $region44
      $region43: #{property_predictor_forward.1} parent=39 // pred_region
        %s231 = smul.u32 64, %s13
        %p232 = scmp.lt.s32.totalorder %s231, 127
        %s233 = scalar_select %p232, %s231, 127
        %s234 = smul.addr %s233, 4
        %s235 = scalar_lea.vmem %s0, %s234
        %s236 = smul.u32 64, %s13
      $region44: #{property_predictor_forward.1} parent=39 // pred_fallthru
        _
    $region40: #{property_predictor_forward.1} parent=5 // pred_fallthru
      _
    %p237 = scmp.le.s32.totalorder 1, %s13
    %p238 = scmp.lt.s32.totalorder %s13, 3
    %p239 = pnand %p237, %p238
    %p240 = pneg %p239
    // Predicated region
    $region45: #{property_predictor_forward.1} parent=5 // pred_check
      _
    $region46: #{property_predictor_forward.1} parent=5 // pred_check_branch
      %242 = sbr.rel (%p239) target = $region48
    $region47: #{property_predictor_forward.1} parent=5 // pred_region
      %s243 = ssub.s32 %s13, 1
      %s244 = smul.u32 64, %s18
      %p245 = scmp.lt.s32.totalorder %s244, 127
      %s246 = scalar_select %p245, %s244, 127
      %s247 = smul.addr %s246, 4
      %s248 = scalar_lea.vmem %s0, %s247
      %p249 = pneg %p39
      %p250 = pneg %p36
      %p251 = pneg %p60
      %p252 = pneg %p57
      %p253 = pneg %p81
      %p254 = pneg %p78
      %p255 = pneg %p102
      %p256 = pneg %p99
      %p257 = pneg %p123
      %p258 = pneg %p120
      %p259 = pneg %p144
      %p260 = pneg %p141
      %p261 = pneg %p165
      %p262 = pneg %p162
      %p263 = pneg %p191
      %p264 = pneg %p188
      %s265 = smul.u32 64, %s18
      %p266 = scmp.lt.s32.totalorder %s265, 127
      %s267 = scalar_select %p266, %s265, 127
      %s268 = smul.addr %s267, 8
      %s269 = scalar_lea.vmem %s7, %s268
      %s270 = smul.u32 64, %s18
      %p271 = scmp.lt.s32.totalorder %s270, 127
      %s272 = scalar_select %p271, %s270, 127
      %s273 = smul.addr %s272, 4
      %s274 = scalar_lea.vmem %s0, %s273
      %s275 = smul.u32 64, %s18
      %s276 = smul.u32 64, %s18
      %p277 = scmp.lt.s32.totalorder %s276, 127
      %s278 = scalar_select %p277, %s276, 127
      %s279 = smul.addr %s278, 8
      %s280 = scalar_lea.vmem %s7, %s279
      %s281 = smul.u32 64, %s18
      %v283 = vld [vmem:[%s274] sm:$0xf]
      %v284 = vld [vmem:[%s274 + $0x4] sm:$0xf]
      %v285 = vld [vmem:[%s274 + $0x8] sm:$0xf]
      %v286 = vld [vmem:[%s274 + $0xc] sm:$0xf]
      %v287 = vld [vmem:[%s274 + $0x10] sm:$0xf]
      %v288 = vld [vmem:[%s274 + $0x14] sm:$0xf]
      %v289 = vld [vmem:[%s274 + $0x18] sm:$0xf]
      %v290 = vld [vmem:[%s274 + $0x1c] sm:$0xf]
      %v291 = vld [vmem:[%s274 + $0x20] sm:$0xf]
      %v292 = vld [vmem:[%s274 + $0x24] sm:$0xf]
      %v293 = vld [vmem:[%s274 + $0x28] sm:$0xf]
      %v294 = vld [vmem:[%s274 + $0x2c] sm:$0xf]
      %v295 = vld [vmem:[%s274 + $0x30] sm:$0xf]
      %v296 = vld [vmem:[%s274 + $0x34] sm:$0xf]
      %v297 = vld [vmem:[%s274 + $0x38] sm:$0xf]
      %v298 = vld [vmem:[%s274 + $0x3c] sm:$0xf]
      %v299 = vld [vmem:[%s274 + $0x40] sm:$0xf]
      %v300 = vld [vmem:[%s274 + $0x44] sm:$0xf]
      %v301 = vld [vmem:[%s274 + $0x48] sm:$0xf]
      %v302 = vld [vmem:[%s274 + $0x4c] sm:$0xf]
      %v303 = vld [vmem:[%s274 + $0x50] sm:$0xf]
      %v304 = vld [vmem:[%s274 + $0x54] sm:$0xf]
      %v305 = vld [vmem:[%s274 + $0x58] sm:$0xf]
      %v306 = vld [vmem:[%s274 + $0x5c] sm:$0xf]
      %v307 = vld [vmem:[%s274 + $0x60] sm:$0xf]
      %v308 = vld [vmem:[%s274 + $0x64] sm:$0xf]
      %v309 = vld [vmem:[%s274 + $0x68] sm:$0xf]
      %v310 = vld [vmem:[%s274 + $0x6c] sm:$0xf]
      %v311 = vld [vmem:[%s274 + $0x70] sm:$0xf]
      %v312 = vld [vmem:[%s274 + $0x74] sm:$0xf]
      %v313 = vld [vmem:[%s274 + $0x78] sm:$0xf]
      %v314 = vld [vmem:[%s274 + $0x7c] sm:$0xf]
      %v315 = vld [vmem:[%s274 + $0x80] sm:$0xf]
      %v316 = vld [vmem:[%s274 + $0x84] sm:$0xf]
      %v317 = vld [vmem:[%s274 + $0x88] sm:$0xf]
      %v318 = vld [vmem:[%s274 + $0x8c] sm:$0xf]
      %v319 = vld [vmem:[%s274 + $0x90] sm:$0xf]
      %v320 = vld [vmem:[%s274 + $0x94] sm:$0xf]
      %v321 = vld [vmem:[%s274 + $0x98] sm:$0xf]
      %v322 = vld [vmem:[%s274 + $0x9c] sm:$0xf]
      %v323 = vld [vmem:[%s274 + $0xa0] sm:$0xf]
      %v324 = vld [vmem:[%s274 + $0xa4] sm:$0xf]
      %v325 = vld [vmem:[%s274 + $0xa8] sm:$0xf]
      %v326 = vld [vmem:[%s274 + $0xac] sm:$0xf]
      %v327 = vld [vmem:[%s274 + $0xb0] sm:$0xf]
      %v328 = vld [vmem:[%s274 + $0xb4] sm:$0xf]
      %v329 = vld [vmem:[%s274 + $0xb8] sm:$0xf]
      %v330 = vld [vmem:[%s274 + $0xbc] sm:$0xf]
      %v331 = vld [vmem:[%s274 + $0xc0] sm:$0xf]
      %v332 = vld [vmem:[%s274 + $0xc4] sm:$0xf]
      %v333 = vld [vmem:[%s274 + $0xc8] sm:$0xf]
      %v334 = vld [vmem:[%s274 + $0xcc] sm:$0xf]
      %v335 = vld [vmem:[%s274 + $0xd0] sm:$0xf]
      %v336 = vld [vmem:[%s274 + $0xd4] sm:$0xf]
      %v337 = vld [vmem:[%s274 + $0xd8] sm:$0xf]
      %v338 = vld [vmem:[%s274 + $0xdc] sm:$0xf]
      %v339 = vld [vmem:[%s274 + $0xe0] sm:$0xf]
      %v340 = vld [vmem:[%s274 + $0xe4] sm:$0xf]
      %v341 = vld [vmem:[%s274 + $0xe8] sm:$0xf]
      %v342 = vld [vmem:[%s274 + $0xec] sm:$0xf]
      %v343 = vld [vmem:[%s274 + $0xf0] sm:$0xf]
      %v344 = vld [vmem:[%s274 + $0xf4] sm:$0xf]
      %v345 = vld [vmem:[%s274 + $0xf8] sm:$0xf]
      %v346 = vld [vmem:[%s274 + $0xfc] sm:$0xf]
      %v347 = vld [vmem:[%s1] sm:$0xf]
      %v348 = vld [vmem:[%s1 + $0x4] sm:$0xf]
      %v349 = vld [vmem:[%s1 + $0x8] sm:$0xf]
      %v350 = vld [vmem:[%s1 + $0xc] sm:$0xf]
      %v351 = vld [vmem:[%s2] sm:$0x1]
      %v353 = vlaneseq
      %v354 = vshrl.u32 %v353, 7
      %v355 = vsub.s32 0, %v354
      %v356 = vrot.slane %v351, %v355
      %v422 = vunpack.c.l.b16 %v283
      %v423 = vunpack.c.l.b16 %v284
      %v424 = vunpack.c.l.b16 %v285
      %v425 = vunpack.c.l.b16 %v286
      %v426 = vunpack.c.l.b16 %v287
      %v427 = vunpack.c.l.b16 %v288
      %v428 = vunpack.c.l.b16 %v289
      %v429 = vunpack.c.l.b16 %v290
      %v430 = vunpack.c.l.b16 %v291
      %v431 = vunpack.c.l.b16 %v292
      %v432 = vunpack.c.l.b16 %v293
      %v433 = vunpack.c.l.b16 %v294
      %v434 = vunpack.c.l.b16 %v295
      %v435 = vunpack.c.l.b16 %v296
      %v436 = vunpack.c.l.b16 %v297
      %v437 = vunpack.c.l.b16 %v298
      %v438 = vunpack.c.l.b16 %v299
      %v439 = vunpack.c.l.b16 %v300
      %v440 = vunpack.c.l.b16 %v301
      %v441 = vunpack.c.l.b16 %v302
      %v442 = vunpack.c.l.b16 %v303
      %v443 = vunpack.c.l.b16 %v304
      %v444 = vunpack.c.l.b16 %v305
      %v445 = vunpack.c.l.b16 %v306
      %v446 = vunpack.c.l.b16 %v307
      %v447 = vunpack.c.l.b16 %v308
      %v448 = vunpack.c.l.b16 %v309
      %v449 = vunpack.c.l.b16 %v310
      %v450 = vunpack.c.l.b16 %v311
      %v451 = vunpack.c.l.b16 %v312
      %v452 = vunpack.c.l.b16 %v313
      %v453 = vunpack.c.l.b16 %v314
      %v454 = vunpack.c.l.b16 %v315
      %v455 = vunpack.c.l.b16 %v316
      %v456 = vunpack.c.l.b16 %v317
      %v457 = vunpack.c.l.b16 %v318
      %v458 = vunpack.c.l.b16 %v319
      %v459 = vunpack.c.l.b16 %v320
      %v460 = vunpack.c.l.b16 %v321
      %v461 = vunpack.c.l.b16 %v322
      %v462 = vunpack.c.l.b16 %v323
      %v463 = vunpack.c.l.b16 %v324
      %v464 = vunpack.c.l.b16 %v325
      %v465 = vunpack.c.l.b16 %v326
      %v466 = vunpack.c.l.b16 %v327
      %v467 = vunpack.c.l.b16 %v328
      %v468 = vunpack.c.l.b16 %v329
      %v469 = vunpack.c.l.b16 %v330
      %v470 = vunpack.c.l.b16 %v331
      %v471 = vunpack.c.l.b16 %v332
      %v472 = vunpack.c.l.b16 %v333
      %v473 = vunpack.c.l.b16 %v334
      %v474 = vunpack.c.l.b16 %v335
      %v475 = vunpack.c.l.b16 %v336
      %v476 = vunpack.c.l.b16 %v337
      %v477 = vunpack.c.l.b16 %v338
      %v478 = vunpack.c.l.b16 %v339
      %v479 = vunpack.c.l.b16 %v340
      %v480 = vunpack.c.l.b16 %v341
      %v481 = vunpack.c.l.b16 %v342
      %v482 = vunpack.c.l.b16 %v343
      %v483 = vunpack.c.l.b16 %v344
      %v484 = vunpack.c.l.b16 %v345
      %v485 = vunpack.c.l.b16 %v346
      %v486 = vpack.c.b16 %v423, %v422
      %v487 = vpack.c.b16 %v425, %v424
      %v488 = vpack.c.b16 %v427, %v426
      %v489 = vpack.c.b16 %v429, %v428
      %v490 = vpack.c.b16 %v431, %v430
      %v491 = vpack.c.b16 %v433, %v432
      %v492 = vpack.c.b16 %v435, %v434
      %v493 = vpack.c.b16 %v437, %v436
      %v494 = vpack.c.b16 %v439, %v438
      %v495 = vpack.c.b16 %v441, %v440
      %v496 = vpack.c.b16 %v443, %v442
      %v497 = vpack.c.b16 %v445, %v444
      %v498 = vpack.c.b16 %v447, %v446
      %v499 = vpack.c.b16 %v449, %v448
      %v500 = vpack.c.b16 %v451, %v450
      %v501 = vpack.c.b16 %v453, %v452
      %v502 = vpack.c.b16 %v455, %v454
      %v503 = vpack.c.b16 %v457, %v456
      %v504 = vpack.c.b16 %v459, %v458
      %v505 = vpack.c.b16 %v461, %v460
      %v506 = vpack.c.b16 %v463, %v462
      %v507 = vpack.c.b16 %v465, %v464
      %v508 = vpack.c.b16 %v467, %v466
      %v509 = vpack.c.b16 %v469, %v468
      %v510 = vpack.c.b16 %v471, %v470
      %v511 = vpack.c.b16 %v473, %v472
      %v512 = vpack.c.b16 %v475, %v474
      %v513 = vpack.c.b16 %v477, %v476
      %v514 = vpack.c.b16 %v479, %v478
      %v515 = vpack.c.b16 %v481, %v480
      %v516 = vpack.c.b16 %v483, %v482
      %v517 = vpack.c.b16 %v485, %v484
      %v522 = vunpack.c.l.b16 %v347
      %v523 = vunpack.c.l.b16 %v348
      %v524 = vunpack.c.l.b16 %v349
      %v525 = vunpack.c.l.b16 %v350
      %v526 = vpack.c.b16 %v523, %v522
      %v527 = vpack.c.b16 %v525, %v524
      %vm530 = vcmask 261120
      %v532 = vsel %vm530, %v486, 0
      %v535 = vsel %vm530, %v487, 0
      %v538 = vsel %vm530, %v488, 0
      %v541 = vsel %vm530, %v489, 0
      %v544 = vsel %vm530, %v490, 0
      %v547 = vsel %vm530, %v491, 0
      %v550 = vsel %vm530, %v492, 0
      %v553 = vsel %vm530, %v493, 0
      %v556 = vsel %vm530, %v494, 0
      %v559 = vsel %vm530, %v495, 0
      %v562 = vsel %vm530, %v496, 0
      %v565 = vsel %vm530, %v497, 0
      %v568 = vsel %vm530, %v498, 0
      %v571 = vsel %vm530, %v499, 0
      %v574 = vsel %vm530, %v500, 0
      %v577 = vsel %vm530, %v501, 0
      %v580 = vsel %vm530, %v502, 0
      %v583 = vsel %vm530, %v503, 0
      %v586 = vsel %vm530, %v504, 0
      %v589 = vsel %vm530, %v505, 0
      %v592 = vsel %vm530, %v506, 0
      %v595 = vsel %vm530, %v507, 0
      %v598 = vsel %vm530, %v508, 0
      %v601 = vsel %vm530, %v509, 0
      %v604 = vsel %vm530, %v510, 0
      %v607 = vsel %vm530, %v511, 0
      %v610 = vsel %vm530, %v512, 0
      %v613 = vsel %vm530, %v513, 0
      %v616 = vsel %vm530, %v514, 0
      %v619 = vsel %vm530, %v515, 0
      %v622 = vsel %vm530, %v516, 0
      %v625 = vsel %vm530, %v517, 0
      %627 = vmatprep.subr.bf16.mxu0 0
      %628 = vmatpush1.bf16.msra.mxu0 %v526
      %629 = vmatprep.subr.bf16.mxu0 0
      %630 = vmatpush1.bf16.msra.mxu0 %v527
      %631 = vmatprep.subr.bf16.mxu0 0
      %632 = vmatpush1.bf16.msra.mxu0 0
      %633 = vmatprep.subr.bf16.mxu0 0
      %634 = vmatpush1.bf16.msra.mxu0 0
      %635 = vmatprep.subr.bf16.mxu0 0
      %636 = vmatpush1.bf16.msra.mxu0 0
      %637 = vmatprep.subr.bf16.mxu0 0
      %638 = vmatpush1.bf16.msra.mxu0 0
      %639 = vmatprep.subr.bf16.mxu0 0
      %640 = vmatpush1.bf16.msra.mxu0 0
      %641 = vmatprep.subr.bf16.mxu0 0
      %642 = vmatpush1.bf16.msra.mxu0 0
      %643 = vmatprep.subr.bf16.mxu0 0
      %644 = vmatpush1.bf16.msra.mxu0 0
      %645 = vmatprep.subr.bf16.mxu0 0
      %646 = vmatpush1.bf16.msra.mxu0 0
      %647 = vmatprep.subr.bf16.mxu0 0
      %648 = vmatpush1.bf16.msra.mxu0 0
      %649 = vmatprep.subr.bf16.mxu0 0
      %650 = vmatpush1.bf16.msra.mxu0 0
      %651 = vmatprep.subr.bf16.mxu0 0
      %652 = vmatpush1.bf16.msra.mxu0 0
      %653 = vmatprep.subr.bf16.mxu0 0
      %654 = vmatpush1.bf16.msra.mxu0 0
      %655 = vmatprep.subr.bf16.mxu0 0
      %656 = vmatpush1.bf16.msra.mxu0 0
      %657 = vmatprep.subr.bf16.mxu0 0
      %658 = vmatpush1.bf16.msra.mxu0 0
      %659 = vmatprep.mubr.bf16.mxu0 0
      %660 = vmatmul.mubr.bf16.gmra.mrb[0].mxu0 %v532
      %v661 = vpop.f32.mrb[0].mxu0
      %v662 = vadd.f32 %v356, %v661
      %v663 = vpop.f32.mrb[0].mxu0
      %v664 = vpop.f32.mrb[0].mxu0
      %v665 = vadd.f32 %v356, %v664
      %v666 = vpop.f32.mrb[0].mxu0
      %667 = vmatprep.mubr.bf16.mxu0 0
      %668 = vmatmul.mubr.bf16.gmra.mrb[0].mxu0 %v535
      %v669 = vpop.f32.mrb[0].mxu0
      %v670 = vadd.f32 %v356, %v669
      %v671 = vpop.f32.mrb[0].mxu0
      %v672 = vpop.f32.mrb[0].mxu0
      %v673 = vadd.f32 %v356, %v672
      %v674 = vpop.f32.mrb[0].mxu0
      %675 = vmatprep.mubr.bf16.mxu0 0
      %676 = vmatmul.mubr.bf16.gmra.mrb[0].mxu0 %v538
      %v677 = vpop.f32.mrb[0].mxu0
      %v678 = vadd.f32 %v356, %v677
      %v679 = vpop.f32.mrb[0].mxu0
      %v680 = vpop.f32.mrb[0].mxu0
      %v681 = vadd.f32 %v356, %v680
      %v682 = vpop.f32.mrb[0].mxu0
      %683 = vmatprep.mubr.bf16.mxu0 0
      %684 = vmatmul.mubr.bf16.gmra.mrb[0].mxu0 %v541
      %v685 = vpop.f32.mrb[0].mxu0
      %v686 = vadd.f32 %v356, %v685
      %v687 = vpop.f32.mrb[0].mxu0
      %v688 = vpop.f32.mrb[0].mxu0
      %v689 = vadd.f32 %v356, %v688
      %v690 = vpop.f32.mrb[0].mxu0
      %691 = vmatprep.mubr.bf16.mxu0 0
      %692 = vmatmul.mubr.bf16.gmra.mrb[0].mxu0 %v544
      %v693 = vpop.f32.mrb[0].mxu0
      %v694 = vadd.f32 %v356, %v693
      %v695 = vpop.f32.mrb[0].mxu0
      %v696 = vpop.f32.mrb[0].mxu0
      %v697 = vadd.f32 %v356, %v696
      %v698 = vpop.f32.mrb[0].mxu0
      %699 = vmatprep.mubr.bf16.mxu0 0
      %700 = vmatmul.mubr.bf16.gmra.mrb[0].mxu0 %v547
      %v701 = vpop.f32.mrb[0].mxu0
      %v702 = vadd.f32 %v356, %v701
      %v703 = vpop.f32.mrb[0].mxu0
      %v704 = vpop.f32.mrb[0].mxu0
      %v705 = vadd.f32 %v356, %v704
      %v706 = vpop.f32.mrb[0].mxu0
      %707 = vmatprep.mubr.bf16.mxu0 0
      %708 = vmatmul.mubr.bf16.gmra.mrb[0].mxu0 %v550
      %v709 = vpop.f32.mrb[0].mxu0
      %v710 = vadd.f32 %v356, %v709
      %v711 = vpop.f32.mrb[0].mxu0
      %v712 = vpop.f32.mrb[0].mxu0
      %v713 = vadd.f32 %v356, %v712
      %v714 = vpop.f32.mrb[0].mxu0
      %715 = vmatprep.mubr.bf16.mxu0 0
      %716 = vmatmul.mubr.bf16.gmra.mrb[0].mxu0 %v553
      %v717 = vpop.f32.mrb[0].mxu0
      %v718 = vadd.f32 %v356, %v717
      %v719 = vpop.f32.mrb[0].mxu0
      %v720 = vpop.f32.mrb[0].mxu0
      %v721 = vadd.f32 %v356, %v720
      %v722 = vpop.f32.mrb[0].mxu0
      %723 = vmatprep.mubr.bf16.mxu0 0
      %724 = vmatmul.mubr.bf16.gmra.mrb[0].mxu0 %v556
      %v725 = vpop.f32.mrb[0].mxu0
      %v726 = vadd.f32 %v356, %v725
      %v727 = vpop.f32.mrb[0].mxu0
      %v728 = vpop.f32.mrb[0].mxu0
      %v729 = vadd.f32 %v356, %v728
      %v730 = vpop.f32.mrb[0].mxu0
      %731 = vmatprep.mubr.bf16.mxu0 0
      %732 = vmatmul.mubr.bf16.gmra.mrb[0].mxu0 %v559
      %v733 = vpop.f32.mrb[0].mxu0
      %v734 = vadd.f32 %v356, %v733
      %v735 = vpop.f32.mrb[0].mxu0
      %v736 = vpop.f32.mrb[0].mxu0
      %v737 = vadd.f32 %v356, %v736
      %v738 = vpop.f32.mrb[0].mxu0
      %739 = vmatprep.mubr.bf16.mxu0 0
      %740 = vmatmul.mubr.bf16.gmra.mrb[0].mxu0 %v562
      %v741 = vpop.f32.mrb[0].mxu0
      %v742 = vadd.f32 %v356, %v741
      %v743 = vpop.f32.mrb[0].mxu0
      %v744 = vpop.f32.mrb[0].mxu0
      %v745 = vadd.f32 %v356, %v744
      %v746 = vpop.f32.mrb[0].mxu0
      %747 = vmatprep.mubr.bf16.mxu0 0
      %748 = vmatmul.mubr.bf16.gmra.mrb[0].mxu0 %v565
      %v749 = vpop.f32.mrb[0].mxu0
      %v750 = vadd.f32 %v356, %v749
      %v751 = vpop.f32.mrb[0].mxu0
      %v752 = vpop.f32.mrb[0].mxu0
      %v753 = vadd.f32 %v356, %v752
      %v754 = vpop.f32.mrb[0].mxu0
      %755 = vmatprep.mubr.bf16.mxu0 0
      %756 = vmatmul.mubr.bf16.gmra.mrb[0].mxu0 %v568
      %v757 = vpop.f32.mrb[0].mxu0
      %v758 = vadd.f32 %v356, %v757
      %v759 = vpop.f32.mrb[0].mxu0
      %v760 = vpop.f32.mrb[0].mxu0
      %v761 = vadd.f32 %v356, %v760
      %v762 = vpop.f32.mrb[0].mxu0
      %763 = vmatprep.mubr.bf16.mxu0 0
      %764 = vmatmul.mubr.bf16.gmra.mrb[0].mxu0 %v571
      %v765 = vpop.f32.mrb[0].mxu0
      %v766 = vadd.f32 %v356, %v765
      %v767 = vpop.f32.mrb[0].mxu0
      %v768 = vpop.f32.mrb[0].mxu0
      %v769 = vadd.f32 %v356, %v768
      %v770 = vpop.f32.mrb[0].mxu0
      %771 = vmatprep.mubr.bf16.mxu0 0
      %772 = vmatmul.mubr.bf16.gmra.mrb[0].mxu0 %v574
      %v773 = vpop.f32.mrb[0].mxu0
      %v774 = vadd.f32 %v356, %v773
      %v775 = vpop.f32.mrb[0].mxu0
      %v776 = vpop.f32.mrb[0].mxu0
      %v777 = vadd.f32 %v356, %v776
      %v778 = vpop.f32.mrb[0].mxu0
      %779 = vmatprep.mubr.bf16.mxu0 0
      %780 = vmatmul.mubr.bf16.gmra.mrb[0].mxu0 %v577
      %v781 = vpop.f32.mrb[0].mxu0
      %v782 = vadd.f32 %v356, %v781
      %v783 = vpop.f32.mrb[0].mxu0
      %v784 = vpop.f32.mrb[0].mxu0
      %v785 = vadd.f32 %v356, %v784
      %v786 = vpop.f32.mrb[0].mxu0
      %787 = vmatprep.mubr.bf16.mxu0 0
      %788 = vmatmul.mubr.bf16.gmra.mrb[0].mxu0 %v580
      %v789 = vpop.f32.mrb[0].mxu0
      %v790 = vadd.f32 %v356, %v789
      %v791 = vpop.f32.mrb[0].mxu0
      %v792 = vpop.f32.mrb[0].mxu0
      %v793 = vadd.f32 %v356, %v792
      %v794 = vpop.f32.mrb[0].mxu0
      %795 = vmatprep.mubr.bf16.mxu0 0
      %796 = vmatmul.mubr.bf16.gmra.mrb[0].mxu0 %v583
      %v797 = vpop.f32.mrb[0].mxu0
      %v798 = vadd.f32 %v356, %v797
      %v799 = vpop.f32.mrb[0].mxu0
      %v800 = vpop.f32.mrb[0].mxu0
      %v801 = vadd.f32 %v356, %v800
      %v802 = vpop.f32.mrb[0].mxu0
      %803 = vmatprep.mubr.bf16.mxu0 0
      %804 = vmatmul.mubr.bf16.gmra.mrb[0].mxu0 %v586
      %v805 = vpop.f32.mrb[0].mxu0
      %v806 = vadd.f32 %v356, %v805
      %v807 = vpop.f32.mrb[0].mxu0
      %v808 = vpop.f32.mrb[0].mxu0
      %v809 = vadd.f32 %v356, %v808
      %v810 = vpop.f32.mrb[0].mxu0
      %811 = vmatprep.mubr.bf16.mxu0 0
      %812 = vmatmul.mubr.bf16.gmra.mrb[0].mxu0 %v589
      %v813 = vpop.f32.mrb[0].mxu0
      %v814 = vadd.f32 %v356, %v813
      %v815 = vpop.f32.mrb[0].mxu0
      %v816 = vpop.f32.mrb[0].mxu0
      %v817 = vadd.f32 %v356, %v816
      %v818 = vpop.f32.mrb[0].mxu0
      %819 = vmatprep.mubr.bf16.mxu0 0
      %820 = vmatmul.mubr.bf16.gmra.mrb[0].mxu0 %v592
      %v821 = vpop.f32.mrb[0].mxu0
      %v822 = vadd.f32 %v356, %v821
      %v823 = vpop.f32.mrb[0].mxu0
      %v824 = vpop.f32.mrb[0].mxu0
      %v825 = vadd.f32 %v356, %v824
      %v826 = vpop.f32.mrb[0].mxu0
      %827 = vmatprep.mubr.bf16.mxu0 0
      %828 = vmatmul.mubr.bf16.gmra.mrb[0].mxu0 %v595
      %v829 = vpop.f32.mrb[0].mxu0
      %v830 = vadd.f32 %v356, %v829
      %v831 = vpop.f32.mrb[0].mxu0
      %v832 = vpop.f32.mrb[0].mxu0
      %v833 = vadd.f32 %v356, %v832
      %v834 = vpop.f32.mrb[0].mxu0
      %835 = vmatprep.mubr.bf16.mxu0 0
      %836 = vmatmul.mubr.bf16.gmra.mrb[0].mxu0 %v598
      %v837 = vpop.f32.mrb[0].mxu0
      %v838 = vadd.f32 %v356, %v837
      %v839 = vpop.f32.mrb[0].mxu0
      %v840 = vpop.f32.mrb[0].mxu0
      %v841 = vadd.f32 %v356, %v840
      %v842 = vpop.f32.mrb[0].mxu0
      %843 = vmatprep.mubr.bf16.mxu0 0
      %844 = vmatmul.mubr.bf16.gmra.mrb[0].mxu0 %v601
      %v845 = vpop.f32.mrb[0].mxu0
      %v846 = vadd.f32 %v356, %v845
      %v847 = vpop.f32.mrb[0].mxu0
      %v848 = vpop.f32.mrb[0].mxu0
      %v849 = vadd.f32 %v356, %v848
      %v850 = vpop.f32.mrb[0].mxu0
      %851 = vmatprep.mubr.bf16.mxu0 0
      %852 = vmatmul.mubr.bf16.gmra.mrb[0].mxu0 %v604
      %v853 = vpop.f32.mrb[0].mxu0
      %v854 = vadd.f32 %v356, %v853
      %v855 = vpop.f32.mrb[0].mxu0
      %v856 = vpop.f32.mrb[0].mxu0
      %v857 = vadd.f32 %v356, %v856
      %v858 = vpop.f32.mrb[0].mxu0
      %859 = vmatprep.mubr.bf16.mxu0 0
      %860 = vmatmul.mubr.bf16.gmra.mrb[0].mxu0 %v607
      %v861 = vpop.f32.mrb[0].mxu0
      %v862 = vadd.f32 %v356, %v861
      %v863 = vpop.f32.mrb[0].mxu0
      %v864 = vpop.f32.mrb[0].mxu0
      %v865 = vadd.f32 %v356, %v864
      %v866 = vpop.f32.mrb[0].mxu0
      %867 = vmatprep.mubr.bf16.mxu0 0
      %868 = vmatmul.mubr.bf16.gmra.mrb[0].mxu0 %v610
      %v869 = vpop.f32.mrb[0].mxu0
      %v870 = vadd.f32 %v356, %v869
      %v871 = vpop.f32.mrb[0].mxu0
      %v872 = vpop.f32.mrb[0].mxu0
      %v873 = vadd.f32 %v356, %v872
      %v874 = vpop.f32.mrb[0].mxu0
      %875 = vmatprep.mubr.bf16.mxu0 0
      %876 = vmatmul.mubr.bf16.gmra.mrb[0].mxu0 %v613
      %v877 = vpop.f32.mrb[0].mxu0
      %v878 = vadd.f32 %v356, %v877
      %v879 = vpop.f32.mrb[0].mxu0
      %v880 = vpop.f32.mrb[0].mxu0
      %v881 = vadd.f32 %v356, %v880
      %v882 = vpop.f32.mrb[0].mxu0
      %883 = vmatprep.mubr.bf16.mxu0 0
      %884 = vmatmul.mubr.bf16.gmra.mrb[0].mxu0 %v616
      %v885 = vpop.f32.mrb[0].mxu0
      %v886 = vadd.f32 %v356, %v885
      %v887 = vpop.f32.mrb[0].mxu0
      %v888 = vpop.f32.mrb[0].mxu0
      %v889 = vadd.f32 %v356, %v888
      %v890 = vpop.f32.mrb[0].mxu0
      %891 = vmatprep.mubr.bf16.mxu0 0
      %892 = vmatmul.mubr.bf16.gmra.mrb[0].mxu0 %v619
      %v893 = vpop.f32.mrb[0].mxu0
      %v894 = vadd.f32 %v356, %v893
      %v895 = vpop.f32.mrb[0].mxu0
      %v896 = vpop.f32.mrb[0].mxu0
      %v897 = vadd.f32 %v356, %v896
      %v898 = vpop.f32.mrb[0].mxu0
      %899 = vmatprep.mubr.bf16.mxu0 0
      %900 = vmatmul.mubr.bf16.gmra.mrb[0].mxu0 %v622
      %v901 = vpop.f32.mrb[0].mxu0
      %v902 = vadd.f32 %v356, %v901
      %v903 = vpop.f32.mrb[0].mxu0
      %v904 = vpop.f32.mrb[0].mxu0
      %v905 = vadd.f32 %v356, %v904
      %v906 = vpop.f32.mrb[0].mxu0
      %907 = vmatprep.mubr.bf16.mxu0 0
      %908 = vmatmul.mubr.bf16.gmra.mrb[0].mxu0 %v625
      %v909 = vpop.f32.mrb[0].mxu0
      %v910 = vadd.f32 %v356, %v909
      %v911 = vpop.f32.mrb[0].mxu0
      %v912 = vpop.f32.mrb[0].mxu0
      %v913 = vadd.f32 %v356, %v912
      %v914 = vpop.f32.mrb[0].mxu0
      %915 = vdwg.mxu0
      %v916 = vmax.f32 %v662, 0.0
      %v917 = vmax.f32 %v665, 0.0
      %v918 = vmax.f32 %v670, 0.0
      %v919 = vmax.f32 %v673, 0.0
      %v920 = vmax.f32 %v678, 0.0
      %v921 = vmax.f32 %v681, 0.0
      %v922 = vmax.f32 %v686, 0.0
      %v923 = vmax.f32 %v689, 0.0
      %v924 = vmax.f32 %v694, 0.0
      %v925 = vmax.f32 %v697, 0.0
      %v926 = vmax.f32 %v702, 0.0
      %v927 = vmax.f32 %v705, 0.0
      %v928 = vmax.f32 %v710, 0.0
      %v929 = vmax.f32 %v713, 0.0
      %v930 = vmax.f32 %v718, 0.0
      %v931 = vmax.f32 %v721, 0.0
      %v932 = vmax.f32 %v726, 0.0
      %v933 = vmax.f32 %v729, 0.0
      %v934 = vmax.f32 %v734, 0.0
      %v935 = vmax.f32 %v737, 0.0
      %v936 = vmax.f32 %v742, 0.0
      %v937 = vmax.f32 %v745, 0.0
      %v938 = vmax.f32 %v750, 0.0
      %v939 = vmax.f32 %v753, 0.0
      %v940 = vmax.f32 %v758, 0.0
      %v941 = vmax.f32 %v761, 0.0
      %v942 = vmax.f32 %v766, 0.0
      %v943 = vmax.f32 %v769, 0.0
      %v944 = vmax.f32 %v774, 0.0
      %v945 = vmax.f32 %v777, 0.0
      %v946 = vmax.f32 %v782, 0.0
      %v947 = vmax.f32 %v785, 0.0
      %v948 = vmax.f32 %v790, 0.0
      %v949 = vmax.f32 %v793, 0.0
      %v950 = vmax.f32 %v798, 0.0
      %v951 = vmax.f32 %v801, 0.0
      %v952 = vmax.f32 %v806, 0.0
      %v953 = vmax.f32 %v809, 0.0
      %v954 = vmax.f32 %v814, 0.0
      %v955 = vmax.f32 %v817, 0.0
      %v956 = vmax.f32 %v822, 0.0
      %v957 = vmax.f32 %v825, 0.0
      %v958 = vmax.f32 %v830, 0.0
      %v959 = vmax.f32 %v833, 0.0
      %v960 = vmax.f32 %v838, 0.0
      %v961 = vmax.f32 %v841, 0.0
      %v962 = vmax.f32 %v846, 0.0
      %v963 = vmax.f32 %v849, 0.0
      %v964 = vmax.f32 %v854, 0.0
      %v965 = vmax.f32 %v857, 0.0
      %v966 = vmax.f32 %v862, 0.0
      %v967 = vmax.f32 %v865, 0.0
      %v968 = vmax.f32 %v870, 0.0
      %v969 = vmax.f32 %v873, 0.0
      %v970 = vmax.f32 %v878, 0.0
      %v971 = vmax.f32 %v881, 0.0
      %v972 = vmax.f32 %v886, 0.0
      %v973 = vmax.f32 %v889, 0.0
      %v974 = vmax.f32 %v894, 0.0
      %v975 = vmax.f32 %v897, 0.0
      %v976 = vmax.f32 %v902, 0.0
      %v977 = vmax.f32 %v905, 0.0
      %v978 = vmax.f32 %v910, 0.0
      %v979 = vmax.f32 %v913, 0.0
      %v980 = vpack.c.bf16 %v917, %v916
      %v981 = vpack.c.bf16 %v919, %v918
      %v982 = vpack.c.bf16 %v921, %v920
      %v983 = vpack.c.bf16 %v923, %v922
      %v984 = vpack.c.bf16 %v925, %v924
      %v985 = vpack.c.bf16 %v927, %v926
      %v986 = vpack.c.bf16 %v929, %v928
      %v987 = vpack.c.bf16 %v931, %v930
      %v988 = vpack.c.bf16 %v933, %v932
      %v989 = vpack.c.bf16 %v935, %v934
      %v990 = vpack.c.bf16 %v937, %v936
      %v991 = vpack.c.bf16 %v939, %v938
      %v992 = vpack.c.bf16 %v941, %v940
      %v993 = vpack.c.bf16 %v943, %v942
      %v994 = vpack.c.bf16 %v945, %v944
      %v995 = vpack.c.bf16 %v947, %v946
      %v996 = vpack.c.bf16 %v949, %v948
      %v997 = vpack.c.bf16 %v951, %v950
      %v998 = vpack.c.bf16 %v953, %v952
      %v999 = vpack.c.bf16 %v955, %v954
      %v1000 = vpack.c.bf16 %v957, %v956
      %v1001 = vpack.c.bf16 %v959, %v958
      %v1002 = vpack.c.bf16 %v961, %v960
      %v1003 = vpack.c.bf16 %v963, %v962
      %v1004 = vpack.c.bf16 %v965, %v964
      %v1005 = vpack.c.bf16 %v967, %v966
      %v1006 = vpack.c.bf16 %v969, %v968
      %v1007 = vpack.c.bf16 %v971, %v970
      %v1008 = vpack.c.bf16 %v973, %v972
      %v1009 = vpack.c.bf16 %v975, %v974
      %v1010 = vpack.c.bf16 %v977, %v976
      %v1011 = vpack.c.bf16 %v979, %v978
      %v1012 = vld [vmem:[%s3] sm:$0xf]
      %v1013 = vld [vmem:[%s3 + $0x4] sm:$0xf]
      %v1014 = vld [vmem:[%s3 + $0x8] sm:$0xf]
      %v1015 = vld [vmem:[%s3 + $0xc] sm:$0xf]
      %v1016 = vld [vmem:[%s3 + $0x10] sm:$0xf]
      %v1017 = vld [vmem:[%s3 + $0x14] sm:$0xf]
      %v1018 = vld [vmem:[%s3 + $0x18] sm:$0xf]
      %v1019 = vld [vmem:[%s3 + $0x1c] sm:$0xf]
      %v1020 = vld [vmem:[%s3 + $0x20] sm:$0xf]
      %v1021 = vld [vmem:[%s3 + $0x24] sm:$0xf]
      %v1022 = vld [vmem:[%s3 + $0x28] sm:$0xf]
      %v1023 = vld [vmem:[%s3 + $0x2c] sm:$0xf]
      %v1024 = vld [vmem:[%s3 + $0x30] sm:$0xf]
      %v1025 = vld [vmem:[%s3 + $0x34] sm:$0xf]
      %v1026 = vld [vmem:[%s3 + $0x38] sm:$0xf]
      %v1027 = vld [vmem:[%s3 + $0x3c] sm:$0xf]
      %v1028 = vld [vmem:[%s4] sm:$0x1]
      %v1030 = vlaneseq
      %v1031 = vshrl.u32 %v1030, 7
      %v1032 = vsub.s32 0, %v1031
      %v1033 = vrot.slane %v1028, %v1032
      %v1051 = vunpack.c.l.b16 %v1012
      %v1052 = vunpack.c.l.b16 %v1013
      %v1053 = vunpack.c.l.b16 %v1014
      %v1054 = vunpack.c.l.b16 %v1015
      %v1055 = vunpack.c.l.b16 %v1016
      %v1056 = vunpack.c.l.b16 %v1017
      %v1057 = vunpack.c.l.b16 %v1018
      %v1058 = vunpack.c.l.b16 %v1019
      %v1059 = vunpack.c.l.b16 %v1020
      %v1060 = vunpack.c.l.b16 %v1021
      %v1061 = vunpack.c.l.b16 %v1022
      %v1062 = vunpack.c.l.b16 %v1023
      %v1063 = vunpack.c.l.b16 %v1024
      %v1064 = vunpack.c.l.b16 %v1025
      %v1065 = vunpack.c.l.b16 %v1026
      %v1066 = vunpack.c.l.b16 %v1027
      %v1067 = vpack.c.b16 %v1052, %v1051
      %v1068 = vpack.c.b16 %v1054, %v1053
      %v1069 = vpack.c.b16 %v1056, %v1055
      %v1070 = vpack.c.b16 %v1058, %v1057
      %v1071 = vpack.c.b16 %v1060, %v1059
      %v1072 = vpack.c.b16 %v1062, %v1061
      %v1073 = vpack.c.b16 %v1064, %v1063
      %v1074 = vpack.c.b16 %v1066, %v1065
      %1083 = vmatprep.subr.bf16.mxu0 0
      %1084 = vmatpush1.bf16.msra.mxu0 %v1067
      %1085 = vmatprep.subr.bf16.mxu0 0
      %1086 = vmatpush1.bf16.msra.mxu0 %v1068
      %1087 = vmatprep.subr.bf16.mxu0 0
      %1088 = vmatpush1.bf16.msra.mxu0 %v1069
      %1089 = vmatprep.subr.bf16.mxu0 0
      %1090 = vmatpush1.bf16.msra.mxu0 %v1070
      %1091 = vmatprep.subr.bf16.mxu0 0
      %1092 = vmatpush1.bf16.msra.mxu0 %v1071
      %1093 = vmatprep.subr.bf16.mxu0 0
      %1094 = vmatpush1.bf16.msra.mxu0 %v1072
      %1095 = vmatprep.subr.bf16.mxu0 0
      %1096 = vmatpush1.bf16.msra.mxu0 %v1073
      %1097 = vmatprep.subr.bf16.mxu0 0
      %1098 = vmatpush1.bf16.msra.mxu0 %v1074
      %1099 = vmatprep.subr.bf16.mxu0 0
      %1100 = vmatpush1.bf16.msra.mxu0 0
      %1101 = vmatprep.subr.bf16.mxu0 0
      %1102 = vmatpush1.bf16.msra.mxu0 0
      %1103 = vmatprep.subr.bf16.mxu0 0
      %1104 = vmatpush1.bf16.msra.mxu0 0
      %1105 = vmatprep.subr.bf16.mxu0 0
      %1106 = vmatpush1.bf16.msra.mxu0 0
      %1107 = vmatprep.subr.bf16.mxu0 0
      %1108 = vmatpush1.bf16.msra.mxu0 0
      %1109 = vmatprep.subr.bf16.mxu0 0
      %1110 = vmatpush1.bf16.msra.mxu0 0
      %1111 = vmatprep.subr.bf16.mxu0 0
      %1112 = vmatpush1.bf16.msra.mxu0 0
      %1113 = vmatprep.subr.bf16.mxu0 0
      %1114 = vmatpush1.bf16.msra.mxu0 0
      %1115 = vmatprep.mubr.bf16.mxu0 0
      %1116 = vmatmul.mubr.bf16.gmra.mrb[0].mxu0 %v980
      %v1117 = vpop.f32.mrb[0].mxu0
      %v1118 = vadd.f32 %v1033, %v1117
      %v1119 = vpop.f32.mrb[0].mxu0
      %v1120 = vpop.f32.mrb[0].mxu0
      %v1121 = vadd.f32 %v1033, %v1120
      %v1122 = vpop.f32.mrb[0].mxu0
      %1123 = vmatprep.mubr.bf16.mxu0 0
      %1124 = vmatmul.mubr.bf16.gmra.mrb[0].mxu0 %v981
      %v1125 = vpop.f32.mrb[0].mxu0
      %v1126 = vadd.f32 %v1033, %v1125
      %v1127 = vpop.f32.mrb[0].mxu0
      %v1128 = vpop.f32.mrb[0].mxu0
      %v1129 = vadd.f32 %v1033, %v1128
      %v1130 = vpop.f32.mrb[0].mxu0
      %1131 = vmatprep.mubr.bf16.mxu0 0
      %1132 = vmatmul.mubr.bf16.gmra.mrb[0].mxu0 %v982
      %v1133 = vpop.f32.mrb[0].mxu0
      %v1134 = vadd.f32 %v1033, %v1133
      %v1135 = vpop.f32.mrb[0].mxu0
      %v1136 = vpop.f32.mrb[0].mxu0
      %v1137 = vadd.f32 %v1033, %v1136
      %v1138 = vpop.f32.mrb[0].mxu0
      %1139 = vmatprep.mubr.bf16.mxu0 0
      %1140 = vmatmul.mubr.bf16.gmra.mrb[0].mxu0 %v983
      %v1141 = vpop.f32.mrb[0].mxu0
      %v1142 = vadd.f32 %v1033, %v1141
      %v1143 = vpop.f32.mrb[0].mxu0
      %v1144 = vpop.f32.mrb[0].mxu0
      %v1145 = vadd.f32 %v1033, %v1144
      %v1146 = vpop.f32.mrb[0].mxu0
      %1147 = vmatprep.mubr.bf16.mxu0 0
      %1148 = vmatmul.mubr.bf16.gmra.mrb[0].mxu0 %v984
      %v1149 = vpop.f32.mrb[0].mxu0
      %v1150 = vadd.f32 %v1033, %v1149
      %v1151 = vpop.f32.mrb[0].mxu0
      %v1152 = vpop.f32.mrb[0].mxu0
      %v1153 = vadd.f32 %v1033, %v1152
      %v1154 = vpop.f32.mrb[0].mxu0
      %1155 = vmatprep.mubr.bf16.mxu0 0
      %1156 = vmatmul.mubr.bf16.gmra.mrb[0].mxu0 %v985
      %v1157 = vpop.f32.mrb[0].mxu0
      %v1158 = vadd.f32 %v1033, %v1157
      %v1159 = vpop.f32.mrb[0].mxu0
      %v1160 = vpop.f32.mrb[0].mxu0
      %v1161 = vadd.f32 %v1033, %v1160
      %v1162 = vpop.f32.mrb[0].mxu0
      %1163 = vmatprep.mubr.bf16.mxu0 0
      %1164 = vmatmul.mubr.bf16.gmra.mrb[0].mxu0 %v986
      %v1165 = vpop.f32.mrb[0].mxu0
      %v1166 = vadd.f32 %v1033, %v1165
      %v1167 = vpop.f32.mrb[0].mxu0
      %v1168 = vpop.f32.mrb[0].mxu0
      %v1169 = vadd.f32 %v1033, %v1168
      %v1170 = vpop.f32.mrb[0].mxu0
      %1171 = vmatprep.mubr.bf16.mxu0 0
      %1172 = vmatmul.mubr.bf16.gmra.mrb[0].mxu0 %v987
      %v1173 = vpop.f32.mrb[0].mxu0
      %v1174 = vadd.f32 %v1033, %v1173
      %v1175 = vpop.f32.mrb[0].mxu0
      %v1176 = vpop.f32.mrb[0].mxu0
      %v1177 = vadd.f32 %v1033, %v1176
      %v1178 = vpop.f32.mrb[0].mxu0
      %1179 = vmatprep.mubr.bf16.mxu0 0
      %1180 = vmatmul.mubr.bf16.gmra.mrb[0].mxu0 %v988
      %v1181 = vpop.f32.mrb[0].mxu0
      %v1182 = vadd.f32 %v1033, %v1181
      %v1183 = vpop.f32.mrb[0].mxu0
      %v1184 = vpop.f32.mrb[0].mxu0
      %v1185 = vadd.f32 %v1033, %v1184
      %v1186 = vpop.f32.mrb[0].mxu0
      %1187 = vmatprep.mubr.bf16.mxu0 0
      %1188 = vmatmul.mubr.bf16.gmra.mrb[0].mxu0 %v989
      %v1189 = vpop.f32.mrb[0].mxu0
      %v1190 = vadd.f32 %v1033, %v1189
      %v1191 = vpop.f32.mrb[0].mxu0
      %v1192 = vpop.f32.mrb[0].mxu0
      %v1193 = vadd.f32 %v1033, %v1192
      %v1194 = vpop.f32.mrb[0].mxu0
      %1195 = vmatprep.mubr.bf16.mxu0 0
      %1196 = vmatmul.mubr.bf16.gmra.mrb[0].mxu0 %v990
      %v1197 = vpop.f32.mrb[0].mxu0
      %v1198 = vadd.f32 %v1033, %v1197
      %v1199 = vpop.f32.mrb[0].mxu0
      %v1200 = vpop.f32.mrb[0].mxu0
      %v1201 = vadd.f32 %v1033, %v1200
      %v1202 = vpop.f32.mrb[0].mxu0
      %1203 = vmatprep.mubr.bf16.mxu0 0
      %1204 = vmatmul.mubr.bf16.gmra.mrb[0].mxu0 %v991
      %v1205 = vpop.f32.mrb[0].mxu0
      %v1206 = vadd.f32 %v1033, %v1205
      %v1207 = vpop.f32.mrb[0].mxu0
      %v1208 = vpop.f32.mrb[0].mxu0
      %v1209 = vadd.f32 %v1033, %v1208
      %v1210 = vpop.f32.mrb[0].mxu0
      %1211 = vmatprep.mubr.bf16.mxu0 0
      %1212 = vmatmul.mubr.bf16.gmra.mrb[0].mxu0 %v992
      %v1213 = vpop.f32.mrb[0].mxu0
      %v1214 = vadd.f32 %v1033, %v1213
      %v1215 = vpop.f32.mrb[0].mxu0
      %v1216 = vpop.f32.mrb[0].mxu0
      %v1217 = vadd.f32 %v1033, %v1216
      %v1218 = vpop.f32.mrb[0].mxu0
      %1219 = vmatprep.mubr.bf16.mxu0 0
      %1220 = vmatmul.mubr.bf16.gmra.mrb[0].mxu0 %v993
      %v1221 = vpop.f32.mrb[0].mxu0
      %v1222 = vadd.f32 %v1033, %v1221
      %v1223 = vpop.f32.mrb[0].mxu0
      %v1224 = vpop.f32.mrb[0].mxu0
      %v1225 = vadd.f32 %v1033, %v1224
      %v1226 = vpop.f32.mrb[0].mxu0
      %1227 = vmatprep.mubr.bf16.mxu0 0
      %1228 = vmatmul.mubr.bf16.gmra.mrb[0].mxu0 %v994
      %v1229 = vpop.f32.mrb[0].mxu0
      %v1230 = vadd.f32 %v1033, %v1229
      %v1231 = vpop.f32.mrb[0].mxu0
      %v1232 = vpop.f32.mrb[0].mxu0
      %v1233 = vadd.f32 %v1033, %v1232
      %v1234 = vpop.f32.mrb[0].mxu0
      %1235 = vmatprep.mubr.bf16.mxu0 0
      %1236 = vmatmul.mubr.bf16.gmra.mrb[0].mxu0 %v995
      %v1237 = vpop.f32.mrb[0].mxu0
      %v1238 = vadd.f32 %v1033, %v1237
      %v1239 = vpop.f32.mrb[0].mxu0
      %v1240 = vpop.f32.mrb[0].mxu0
      %v1241 = vadd.f32 %v1033, %v1240
      %v1242 = vpop.f32.mrb[0].mxu0
      %1243 = vmatprep.mubr.bf16.mxu0 0
      %1244 = vmatmul.mubr.bf16.gmra.mrb[0].mxu0 %v996
      %v1245 = vpop.f32.mrb[0].mxu0
      %v1246 = vadd.f32 %v1033, %v1245
      %v1247 = vpop.f32.mrb[0].mxu0
      %v1248 = vpop.f32.mrb[0].mxu0
      %v1249 = vadd.f32 %v1033, %v1248
      %v1250 = vpop.f32.mrb[0].mxu0
      %1251 = vmatprep.mubr.bf16.mxu0 0
      %1252 = vmatmul.mubr.bf16.gmra.mrb[0].mxu0 %v997
      %v1253 = vpop.f32.mrb[0].mxu0
      %v1254 = vadd.f32 %v1033, %v1253
      %v1255 = vpop.f32.mrb[0].mxu0
      %v1256 = vpop.f32.mrb[0].mxu0
      %v1257 = vadd.f32 %v1033, %v1256
      %v1258 = vpop.f32.mrb[0].mxu0
      %1259 = vmatprep.mubr.bf16.mxu0 0
      %1260 = vmatmul.mubr.bf16.gmra.mrb[0].mxu0 %v998
      %v1261 = vpop.f32.mrb[0].mxu0
      %v1262 = vadd.f32 %v1033, %v1261
      %v1263 = vpop.f32.mrb[0].mxu0
      %v1264 = vpop.f32.mrb[0].mxu0
      %v1265 = vadd.f32 %v1033, %v1264
      %v1266 = vpop.f32.mrb[0].mxu0
      %1267 = vmatprep.mubr.bf16.mxu0 0
      %1268 = vmatmul.mubr.bf16.gmra.mrb[0].mxu0 %v999
      %v1269 = vpop.f32.mrb[0].mxu0
      %v1270 = vadd.f32 %v1033, %v1269
      %v1271 = vpop.f32.mrb[0].mxu0
      %v1272 = vpop.f32.mrb[0].mxu0
      %v1273 = vadd.f32 %v1033, %v1272
      %v1274 = vpop.f32.mrb[0].mxu0
      %1275 = vmatprep.mubr.bf16.mxu0 0
      %1276 = vmatmul.mubr.bf16.gmra.mrb[0].mxu0 %v1000
      %v1277 = vpop.f32.mrb[0].mxu0
      %v1278 = vadd.f32 %v1033, %v1277
      %v1279 = vpop.f32.mrb[0].mxu0
      %v1280 = vpop.f32.mrb[0].mxu0
      %v1281 = vadd.f32 %v1033, %v1280
      %v1282 = vpop.f32.mrb[0].mxu0
      %1283 = vmatprep.mubr.bf16.mxu0 0
      %1284 = vmatmul.mubr.bf16.gmra.mrb[0].mxu0 %v1001
      %v1285 = vpop.f32.mrb[0].mxu0
      %v1286 = vadd.f32 %v1033, %v1285
      %v1287 = vpop.f32.mrb[0].mxu0
      %v1288 = vpop.f32.mrb[0].mxu0
      %v1289 = vadd.f32 %v1033, %v1288
      %v1290 = vpop.f32.mrb[0].mxu0
      %1291 = vmatprep.mubr.bf16.mxu0 0
      %1292 = vmatmul.mubr.bf16.gmra.mrb[0].mxu0 %v1002
      %v1293 = vpop.f32.mrb[0].mxu0
      %v1294 = vadd.f32 %v1033, %v1293
      %v1295 = vpop.f32.mrb[0].mxu0
      %v1296 = vpop.f32.mrb[0].mxu0
      %v1297 = vadd.f32 %v1033, %v1296
      %v1298 = vpop.f32.mrb[0].mxu0
      %1299 = vmatprep.mubr.bf16.mxu0 0
      %1300 = vmatmul.mubr.bf16.gmra.mrb[0].mxu0 %v1003
      %v1301 = vpop.f32.mrb[0].mxu0
      %v1302 = vadd.f32 %v1033, %v1301
      %v1303 = vpop.f32.mrb[0].mxu0
      %v1304 = vpop.f32.mrb[0].mxu0
      %v1305 = vadd.f32 %v1033, %v1304
      %v1306 = vpop.f32.mrb[0].mxu0
      %1307 = vmatprep.mubr.bf16.mxu0 0
      %1308 = vmatmul.mubr.bf16.gmra.mrb[0].mxu0 %v1004
      %v1309 = vpop.f32.mrb[0].mxu0
      %v1310 = vadd.f32 %v1033, %v1309
      %v1311 = vpop.f32.mrb[0].mxu0
      %v1312 = vpop.f32.mrb[0].mxu0
      %v1313 = vadd.f32 %v1033, %v1312
      %v1314 = vpop.f32.mrb[0].mxu0
      %1315 = vmatprep.mubr.bf16.mxu0 0
      %1316 = vmatmul.mubr.bf16.gmra.mrb[0].mxu0 %v1005
      %v1317 = vpop.f32.mrb[0].mxu0
      %v1318 = vadd.f32 %v1033, %v1317
      %v1319 = vpop.f32.mrb[0].mxu0
      %v1320 = vpop.f32.mrb[0].mxu0
      %v1321 = vadd.f32 %v1033, %v1320
      %v1322 = vpop.f32.mrb[0].mxu0
      %1323 = vmatprep.mubr.bf16.mxu0 0
      %1324 = vmatmul.mubr.bf16.gmra.mrb[0].mxu0 %v1006
      %v1325 = vpop.f32.mrb[0].mxu0
      %v1326 = vadd.f32 %v1033, %v1325
      %v1327 = vpop.f32.mrb[0].mxu0
      %v1328 = vpop.f32.mrb[0].mxu0
      %v1329 = vadd.f32 %v1033, %v1328
      %v1330 = vpop.f32.mrb[0].mxu0
      %1331 = vmatprep.mubr.bf16.mxu0 0
      %1332 = vmatmul.mubr.bf16.gmra.mrb[0].mxu0 %v1007
      %v1333 = vpop.f32.mrb[0].mxu0
      %v1334 = vadd.f32 %v1033, %v1333
      %v1335 = vpop.f32.mrb[0].mxu0
      %v1336 = vpop.f32.mrb[0].mxu0
      %v1337 = vadd.f32 %v1033, %v1336
      %v1338 = vpop.f32.mrb[0].mxu0
      %1339 = vmatprep.mubr.bf16.mxu0 0
      %1340 = vmatmul.mubr.bf16.gmra.mrb[0].mxu0 %v1008
      %v1341 = vpop.f32.mrb[0].mxu0
      %v1342 = vadd.f32 %v1033, %v1341
      %v1343 = vpop.f32.mrb[0].mxu0
      %v1344 = vpop.f32.mrb[0].mxu0
      %v1345 = vadd.f32 %v1033, %v1344
      %v1346 = vpop.f32.mrb[0].mxu0
      %1347 = vmatprep.mubr.bf16.mxu0 0
      %1348 = vmatmul.mubr.bf16.gmra.mrb[0].mxu0 %v1009
      %v1349 = vpop.f32.mrb[0].mxu0
      %v1350 = vadd.f32 %v1033, %v1349
      %v1351 = vpop.f32.mrb[0].mxu0
      %v1352 = vpop.f32.mrb[0].mxu0
      %v1353 = vadd.f32 %v1033, %v1352
      %v1354 = vpop.f32.mrb[0].mxu0
      %1355 = vmatprep.mubr.bf16.mxu0 0
      %1356 = vmatmul.mubr.bf16.gmra.mrb[0].mxu0 %v1010
      %v1357 = vpop.f32.mrb[0].mxu0
      %v1358 = vadd.f32 %v1033, %v1357
      %v1359 = vpop.f32.mrb[0].mxu0
      %v1360 = vpop.f32.mrb[0].mxu0
      %v1361 = vadd.f32 %v1033, %v1360
      %v1362 = vpop.f32.mrb[0].mxu0
      %1363 = vmatprep.mubr.bf16.mxu0 0
      %1364 = vmatmul.mubr.bf16.gmra.mrb[0].mxu0 %v1011
      %v1365 = vpop.f32.mrb[0].mxu0
      %v1366 = vadd.f32 %v1033, %v1365
      %v1367 = vpop.f32.mrb[0].mxu0
      %v1368 = vpop.f32.mrb[0].mxu0
      %v1369 = vadd.f32 %v1033, %v1368
      %v1370 = vpop.f32.mrb[0].mxu0
      %1371 = vdwg.mxu0
      %v1372 = vmax.f32 %v1118, 0.0
      %v1373 = vmax.f32 %v1121, 0.0
      %v1374 = vmax.f32 %v1126, 0.0
      %v1375 = vmax.f32 %v1129, 0.0
      %v1376 = vmax.f32 %v1134, 0.0
      %v1377 = vmax.f32 %v1137, 0.0
      %v1378 = vmax.f32 %v1142, 0.0
      %v1379 = vmax.f32 %v1145, 0.0
      %v1380 = vmax.f32 %v1150, 0.0
      %v1381 = vmax.f32 %v1153, 0.0
      %v1382 = vmax.f32 %v1158, 0.0
      %v1383 = vmax.f32 %v1161, 0.0
      %v1384 = vmax.f32 %v1166, 0.0
      %v1385 = vmax.f32 %v1169, 0.0
      %v1386 = vmax.f32 %v1174, 0.0
      %v1387 = vmax.f32 %v1177, 0.0
      %v1388 = vmax.f32 %v1182, 0.0
      %v1389 = vmax.f32 %v1185, 0.0
      %v1390 = vmax.f32 %v1190, 0.0
      %v1391 = vmax.f32 %v1193, 0.0
      %v1392 = vmax.f32 %v1198, 0.0
      %v1393 = vmax.f32 %v1201, 0.0
      %v1394 = vmax.f32 %v1206, 0.0
      %v1395 = vmax.f32 %v1209, 0.0
      %v1396 = vmax.f32 %v1214, 0.0
      %v1397 = vmax.f32 %v1217, 0.0
      %v1398 = vmax.f32 %v1222, 0.0
      %v1399 = vmax.f32 %v1225, 0.0
      %v1400 = vmax.f32 %v1230, 0.0
      %v1401 = vmax.f32 %v1233, 0.0
      %v1402 = vmax.f32 %v1238, 0.0
      %v1403 = vmax.f32 %v1241, 0.0
      %v1404 = vmax.f32 %v1246, 0.0
      %v1405 = vmax.f32 %v1249, 0.0
      %v1406 = vmax.f32 %v1254, 0.0
      %v1407 = vmax.f32 %v1257, 0.0
      %v1408 = vmax.f32 %v1262, 0.0
      %v1409 = vmax.f32 %v1265, 0.0
      %v1410 = vmax.f32 %v1270, 0.0
      %v1411 = vmax.f32 %v1273, 0.0
      %v1412 = vmax.f32 %v1278, 0.0
      %v1413 = vmax.f32 %v1281, 0.0
      %v1414 = vmax.f32 %v1286, 0.0
      %v1415 = vmax.f32 %v1289, 0.0
      %v1416 = vmax.f32 %v1294, 0.0
      %v1417 = vmax.f32 %v1297, 0.0
      %v1418 = vmax.f32 %v1302, 0.0
      %v1419 = vmax.f32 %v1305, 0.0
      %v1420 = vmax.f32 %v1310, 0.0
      %v1421 = vmax.f32 %v1313, 0.0
      %v1422 = vmax.f32 %v1318, 0.0
      %v1423 = vmax.f32 %v1321, 0.0
      %v1424 = vmax.f32 %v1326, 0.0
      %v1425 = vmax.f32 %v1329, 0.0
      %v1426 = vmax.f32 %v1334, 0.0
      %v1427 = vmax.f32 %v1337, 0.0
      %v1428 = vmax.f32 %v1342, 0.0
      %v1429 = vmax.f32 %v1345, 0.0
      %v1430 = vmax.f32 %v1350, 0.0
      %v1431 = vmax.f32 %v1353, 0.0
      %v1432 = vmax.f32 %v1358, 0.0
      %v1433 = vmax.f32 %v1361, 0.0
      %v1434 = vmax.f32 %v1366, 0.0
      %v1435 = vmax.f32 %v1369, 0.0
      %v1436 = vpack.c.bf16 %v1373, %v1372
      %v1437 = vpack.c.bf16 %v1375, %v1374
      %v1438 = vpack.c.bf16 %v1377, %v1376
      %v1439 = vpack.c.bf16 %v1379, %v1378
      %v1440 = vpack.c.bf16 %v1381, %v1380
      %v1441 = vpack.c.bf16 %v1383, %v1382
      %v1442 = vpack.c.bf16 %v1385, %v1384
      %v1443 = vpack.c.bf16 %v1387, %v1386
      %v1444 = vpack.c.bf16 %v1389, %v1388
      %v1445 = vpack.c.bf16 %v1391, %v1390
      %v1446 = vpack.c.bf16 %v1393, %v1392
      %v1447 = vpack.c.bf16 %v1395, %v1394
      %v1448 = vpack.c.bf16 %v1397, %v1396
      %v1449 = vpack.c.bf16 %v1399, %v1398
      %v1450 = vpack.c.bf16 %v1401, %v1400
      %v1451 = vpack.c.bf16 %v1403, %v1402
      %v1452 = vpack.c.bf16 %v1405, %v1404
      %v1453 = vpack.c.bf16 %v1407, %v1406
      %v1454 = vpack.c.bf16 %v1409, %v1408
      %v1455 = vpack.c.bf16 %v1411, %v1410
      %v1456 = vpack.c.bf16 %v1413, %v1412
      %v1457 = vpack.c.bf16 %v1415, %v1414
      %v1458 = vpack.c.bf16 %v1417, %v1416
      %v1459 = vpack.c.bf16 %v1419, %v1418
      %v1460 = vpack.c.bf16 %v1421, %v1420
      %v1461 = vpack.c.bf16 %v1423, %v1422
      %v1462 = vpack.c.bf16 %v1425, %v1424
      %v1463 = vpack.c.bf16 %v1427, %v1426
      %v1464 = vpack.c.bf16 %v1429, %v1428
      %v1465 = vpack.c.bf16 %v1431, %v1430
      %v1466 = vpack.c.bf16 %v1433, %v1432
      %v1467 = vpack.c.bf16 %v1435, %v1434
      %v1468 = vld [vmem:[%s5] sm:$0xf]
      %v1469 = vld [vmem:[%s5 + $0x4] sm:$0xf]
      %v1470 = vld [vmem:[%s5 + $0x8] sm:$0xf]
      %v1471 = vld [vmem:[%s5 + $0xc] sm:$0xf]
      %v1472 = vld [vmem:[%s5 + $0x10] sm:$0xf]
      %v1473 = vld [vmem:[%s5 + $0x14] sm:$0xf]
      %v1474 = vld [vmem:[%s5 + $0x18] sm:$0xf]
      %v1475 = vld [vmem:[%s5 + $0x1c] sm:$0xf]
      %v1476 = vld [vmem:[%s5 + $0x20] sm:$0xf]
      %v1477 = vld [vmem:[%s5 + $0x24] sm:$0xf]
      %v1478 = vld [vmem:[%s5 + $0x28] sm:$0xf]
      %v1479 = vld [vmem:[%s5 + $0x2c] sm:$0xf]
      %v1480 = vld [vmem:[%s5 + $0x30] sm:$0xf]
      %v1481 = vld [vmem:[%s5 + $0x34] sm:$0xf]
      %v1482 = vld [vmem:[%s5 + $0x38] sm:$0xf]
      %v1483 = vld [vmem:[%s5 + $0x3c] sm:$0xf]
      %v1484 = vld [vmem:[%s6] sm:$0x1]
      %v1486 = vlaneseq
      %v1487 = vshrl.u32 %v1486, 7
      %v1488 = vsub.s32 0, %v1487
      %v1489 = vrot.slane %v1484, %v1488
      %v1507 = vunpack.c.l.b16 %v1468
      %v1508 = vunpack.c.l.b16 %v1469
      %v1509 = vunpack.c.l.b16 %v1470
      %v1510 = vunpack.c.l.b16 %v1471
      %v1511 = vunpack.c.l.b16 %v1472
      %v1512 = vunpack.c.l.b16 %v1473
      %v1513 = vunpack.c.l.b16 %v1474
      %v1514 = vunpack.c.l.b16 %v1475
      %v1515 = vunpack.c.l.b16 %v1476
      %v1516 = vunpack.c.l.b16 %v1477
      %v1517 = vunpack.c.l.b16 %v1478
      %v1518 = vunpack.c.l.b16 %v1479
      %v1519 = vunpack.c.l.b16 %v1480
      %v1520 = vunpack.c.l.b16 %v1481
      %v1521 = vunpack.c.l.b16 %v1482
      %v1522 = vunpack.c.l.b16 %v1483
      %v1523 = vpack.c.b16 %v1508, %v1507
      %v1524 = vpack.c.b16 %v1510, %v1509
      %v1525 = vpack.c.b16 %v1512, %v1511
      %v1526 = vpack.c.b16 %v1514, %v1513
      %v1527 = vpack.c.b16 %v1516, %v1515
      %v1528 = vpack.c.b16 %v1518, %v1517
      %v1529 = vpack.c.b16 %v1520, %v1519
      %v1530 = vpack.c.b16 %v1522, %v1521
      %1539 = vmatprep.subr.bf16.mxu0 0
      %1540 = vmatpush1.bf16.msra.mxu0 %v1523
      %1541 = vmatprep.subr.bf16.mxu0 0
      %1542 = vmatpush1.bf16.msra.mxu0 %v1524
      %1543 = vmatprep.subr.bf16.mxu0 0
      %1544 = vmatpush1.bf16.msra.mxu0 %v1525
      %1545 = vmatprep.subr.bf16.mxu0 0
      %1546 = vmatpush1.bf16.msra.mxu0 %v1526
      %1547 = vmatprep.subr.bf16.mxu0 0
      %1548 = vmatpush1.bf16.msra.mxu0 %v1527
      %1549 = vmatprep.subr.bf16.mxu0 0
      %1550 = vmatpush1.bf16.msra.mxu0 %v1528
      %1551 = vmatprep.subr.bf16.mxu0 0
      %1552 = vmatpush1.bf16.msra.mxu0 %v1529
      %1553 = vmatprep.subr.bf16.mxu0 0
      %1554 = vmatpush1.bf16.msra.mxu0 %v1530
      %1555 = vmatprep.subr.bf16.mxu0 0
      %1556 = vmatpush1.bf16.msra.mxu0 0
      %1557 = vmatprep.subr.bf16.mxu0 0
      %1558 = vmatpush1.bf16.msra.mxu0 0
      %1559 = vmatprep.subr.bf16.mxu0 0
      %1560 = vmatpush1.bf16.msra.mxu0 0
      %1561 = vmatprep.subr.bf16.mxu0 0
      %1562 = vmatpush1.bf16.msra.mxu0 0
      %1563 = vmatprep.subr.bf16.mxu0 0
      %1564 = vmatpush1.bf16.msra.mxu0 0
      %1565 = vmatprep.subr.bf16.mxu0 0
      %1566 = vmatpush1.bf16.msra.mxu0 0
      %1567 = vmatprep.subr.bf16.mxu0 0
      %1568 = vmatpush1.bf16.msra.mxu0 0
      %1569 = vmatprep.subr.bf16.mxu0 0
      %1570 = vmatpush1.bf16.msra.mxu0 0
      %1571 = vmatprep.mubr.bf16.mxu0 0
      %1572 = vmatmul.mubr.bf16.gmra.mrb[0].mxu0 %v1436
      %v1573 = vpop.f32.mrb[0].mxu0
      %v1574 = vadd.f32 %v1489, %v1573
      %v1575 = vpop.f32.mrb[0].mxu0
      %v1576 = vpop.f32.mrb[0].mxu0
      %v1577 = vadd.f32 %v1489, %v1576
      %v1578 = vpop.f32.mrb[0].mxu0
      %1579 = vmatprep.mubr.bf16.mxu0 0
      %1580 = vmatmul.mubr.bf16.gmra.mrb[0].mxu0 %v1437
      %v1581 = vpop.f32.mrb[0].mxu0
      %v1582 = vadd.f32 %v1489, %v1581
      %v1583 = vpop.f32.mrb[0].mxu0
      %v1584 = vpop.f32.mrb[0].mxu0
      %v1585 = vadd.f32 %v1489, %v1584
      %v1586 = vpop.f32.mrb[0].mxu0
      %1587 = vmatprep.mubr.bf16.mxu0 0
      %1588 = vmatmul.mubr.bf16.gmra.mrb[0].mxu0 %v1438
      %v1589 = vpop.f32.mrb[0].mxu0
      %v1590 = vadd.f32 %v1489, %v1589
      %v1591 = vpop.f32.mrb[0].mxu0
      %v1592 = vpop.f32.mrb[0].mxu0
      %v1593 = vadd.f32 %v1489, %v1592
      %v1594 = vpop.f32.mrb[0].mxu0
      %1595 = vmatprep.mubr.bf16.mxu0 0
      %1596 = vmatmul.mubr.bf16.gmra.mrb[0].mxu0 %v1439
      %v1597 = vpop.f32.mrb[0].mxu0
      %v1598 = vadd.f32 %v1489, %v1597
      %v1599 = vpop.f32.mrb[0].mxu0
      %v1600 = vpop.f32.mrb[0].mxu0
      %v1601 = vadd.f32 %v1489, %v1600
      %v1602 = vpop.f32.mrb[0].mxu0
      %1603 = vmatprep.mubr.bf16.mxu0 0
      %1604 = vmatmul.mubr.bf16.gmra.mrb[0].mxu0 %v1440
      %v1605 = vpop.f32.mrb[0].mxu0
      %v1606 = vadd.f32 %v1489, %v1605
      %v1607 = vpop.f32.mrb[0].mxu0
      %v1608 = vpop.f32.mrb[0].mxu0
      %v1609 = vadd.f32 %v1489, %v1608
      %v1610 = vpop.f32.mrb[0].mxu0
      %1611 = vmatprep.mubr.bf16.mxu0 0
      %1612 = vmatmul.mubr.bf16.gmra.mrb[0].mxu0 %v1441
      %v1613 = vpop.f32.mrb[0].mxu0
      %v1614 = vadd.f32 %v1489, %v1613
      %v1615 = vpop.f32.mrb[0].mxu0
      %v1616 = vpop.f32.mrb[0].mxu0
      %v1617 = vadd.f32 %v1489, %v1616
      %v1618 = vpop.f32.mrb[0].mxu0
      %1619 = vmatprep.mubr.bf16.mxu0 0
      %1620 = vmatmul.mubr.bf16.gmra.mrb[0].mxu0 %v1442
      %v1621 = vpop.f32.mrb[0].mxu0
      %v1622 = vadd.f32 %v1489, %v1621
      %v1623 = vpop.f32.mrb[0].mxu0
      %v1624 = vpop.f32.mrb[0].mxu0
      %v1625 = vadd.f32 %v1489, %v1624
      %v1626 = vpop.f32.mrb[0].mxu0
      %1627 = vmatprep.mubr.bf16.mxu0 0
      %1628 = vmatmul.mubr.bf16.gmra.mrb[0].mxu0 %v1443
      %v1629 = vpop.f32.mrb[0].mxu0
      %v1630 = vadd.f32 %v1489, %v1629
      %v1631 = vpop.f32.mrb[0].mxu0
      %v1632 = vpop.f32.mrb[0].mxu0
      %v1633 = vadd.f32 %v1489, %v1632
      %v1634 = vpop.f32.mrb[0].mxu0
      %1635 = vmatprep.mubr.bf16.mxu0 0
      %1636 = vmatmul.mubr.bf16.gmra.mrb[0].mxu0 %v1444
      %v1637 = vpop.f32.mrb[0].mxu0
      %v1638 = vadd.f32 %v1489, %v1637
      %v1639 = vpop.f32.mrb[0].mxu0
      %v1640 = vpop.f32.mrb[0].mxu0
      %v1641 = vadd.f32 %v1489, %v1640
      %v1642 = vpop.f32.mrb[0].mxu0
      %1643 = vmatprep.mubr.bf16.mxu0 0
      %1644 = vmatmul.mubr.bf16.gmra.mrb[0].mxu0 %v1445
      %v1645 = vpop.f32.mrb[0].mxu0
      %v1646 = vadd.f32 %v1489, %v1645
      %v1647 = vpop.f32.mrb[0].mxu0
      %v1648 = vpop.f32.mrb[0].mxu0
      %v1649 = vadd.f32 %v1489, %v1648
      %v1650 = vpop.f32.mrb[0].mxu0
      %1651 = vmatprep.mubr.bf16.mxu0 0
      %1652 = vmatmul.mubr.bf16.gmra.mrb[0].mxu0 %v1446
      %v1653 = vpop.f32.mrb[0].mxu0
      %v1654 = vadd.f32 %v1489, %v1653
      %v1655 = vpop.f32.mrb[0].mxu0
      %v1656 = vpop.f32.mrb[0].mxu0
      %v1657 = vadd.f32 %v1489, %v1656
      %v1658 = vpop.f32.mrb[0].mxu0
      %1659 = vmatprep.mubr.bf16.mxu0 0
      %1660 = vmatmul.mubr.bf16.gmra.mrb[0].mxu0 %v1447
      %v1661 = vpop.f32.mrb[0].mxu0
      %v1662 = vadd.f32 %v1489, %v1661
      %v1663 = vpop.f32.mrb[0].mxu0
      %v1664 = vpop.f32.mrb[0].mxu0
      %v1665 = vadd.f32 %v1489, %v1664
      %v1666 = vpop.f32.mrb[0].mxu0
      %1667 = vmatprep.mubr.bf16.mxu0 0
      %1668 = vmatmul.mubr.bf16.gmra.mrb[0].mxu0 %v1448
      %v1669 = vpop.f32.mrb[0].mxu0
      %v1670 = vadd.f32 %v1489, %v1669
      %v1671 = vpop.f32.mrb[0].mxu0
      %v1672 = vpop.f32.mrb[0].mxu0
      %v1673 = vadd.f32 %v1489, %v1672
      %v1674 = vpop.f32.mrb[0].mxu0
      %1675 = vmatprep.mubr.bf16.mxu0 0
      %1676 = vmatmul.mubr.bf16.gmra.mrb[0].mxu0 %v1449
      %v1677 = vpop.f32.mrb[0].mxu0
      %v1678 = vadd.f32 %v1489, %v1677
      %v1679 = vpop.f32.mrb[0].mxu0
      %v1680 = vpop.f32.mrb[0].mxu0
      %v1681 = vadd.f32 %v1489, %v1680
      %v1682 = vpop.f32.mrb[0].mxu0
      %1683 = vmatprep.mubr.bf16.mxu0 0
      %1684 = vmatmul.mubr.bf16.gmra.mrb[0].mxu0 %v1450
      %v1685 = vpop.f32.mrb[0].mxu0
      %v1686 = vadd.f32 %v1489, %v1685
      %v1687 = vpop.f32.mrb[0].mxu0
      %v1688 = vpop.f32.mrb[0].mxu0
      %v1689 = vadd.f32 %v1489, %v1688
      %v1690 = vpop.f32.mrb[0].mxu0
      %1691 = vmatprep.mubr.bf16.mxu0 0
      %1692 = vmatmul.mubr.bf16.gmra.mrb[0].mxu0 %v1451
      %v1693 = vpop.f32.mrb[0].mxu0
      %v1694 = vadd.f32 %v1489, %v1693
      %v1695 = vpop.f32.mrb[0].mxu0
      %v1696 = vpop.f32.mrb[0].mxu0
      %v1697 = vadd.f32 %v1489, %v1696
      %v1698 = vpop.f32.mrb[0].mxu0
      %1699 = vmatprep.mubr.bf16.mxu0 0
      %1700 = vmatmul.mubr.bf16.gmra.mrb[0].mxu0 %v1452
      %v1701 = vpop.f32.mrb[0].mxu0
      %v1702 = vadd.f32 %v1489, %v1701
      %v1703 = vpop.f32.mrb[0].mxu0
      %v1704 = vpop.f32.mrb[0].mxu0
      %v1705 = vadd.f32 %v1489, %v1704
      %v1706 = vpop.f32.mrb[0].mxu0
      %1707 = vmatprep.mubr.bf16.mxu0 0
      %1708 = vmatmul.mubr.bf16.gmra.mrb[0].mxu0 %v1453
      %v1709 = vpop.f32.mrb[0].mxu0
      %v1710 = vadd.f32 %v1489, %v1709
      %v1711 = vpop.f32.mrb[0].mxu0
      %v1712 = vpop.f32.mrb[0].mxu0
      %v1713 = vadd.f32 %v1489, %v1712
      %v1714 = vpop.f32.mrb[0].mxu0
      %1715 = vmatprep.mubr.bf16.mxu0 0
      %1716 = vmatmul.mubr.bf16.gmra.mrb[0].mxu0 %v1454
      %v1717 = vpop.f32.mrb[0].mxu0
      %v1718 = vadd.f32 %v1489, %v1717
      %v1719 = vpop.f32.mrb[0].mxu0
      %v1720 = vpop.f32.mrb[0].mxu0
      %v1721 = vadd.f32 %v1489, %v1720
      %v1722 = vpop.f32.mrb[0].mxu0
      %1723 = vmatprep.mubr.bf16.mxu0 0
      %1724 = vmatmul.mubr.bf16.gmra.mrb[0].mxu0 %v1455
      %v1725 = vpop.f32.mrb[0].mxu0
      %v1726 = vadd.f32 %v1489, %v1725
      %v1727 = vpop.f32.mrb[0].mxu0
      %v1728 = vpop.f32.mrb[0].mxu0
      %v1729 = vadd.f32 %v1489, %v1728
      %v1730 = vpop.f32.mrb[0].mxu0
      %1731 = vmatprep.mubr.bf16.mxu0 0
      %1732 = vmatmul.mubr.bf16.gmra.mrb[0].mxu0 %v1456
      %v1733 = vpop.f32.mrb[0].mxu0
      %v1734 = vadd.f32 %v1489, %v1733
      %v1735 = vpop.f32.mrb[0].mxu0
      %v1736 = vpop.f32.mrb[0].mxu0
      %v1737 = vadd.f32 %v1489, %v1736
      %v1738 = vpop.f32.mrb[0].mxu0
      %1739 = vmatprep.mubr.bf16.mxu0 0
      %1740 = vmatmul.mubr.bf16.gmra.mrb[0].mxu0 %v1457
      %v1741 = vpop.f32.mrb[0].mxu0
      %v1742 = vadd.f32 %v1489, %v1741
      %v1743 = vpop.f32.mrb[0].mxu0
      %v1744 = vpop.f32.mrb[0].mxu0
      %v1745 = vadd.f32 %v1489, %v1744
      %v1746 = vpop.f32.mrb[0].mxu0
      %1747 = vmatprep.mubr.bf16.mxu0 0
      %1748 = vmatmul.mubr.bf16.gmra.mrb[0].mxu0 %v1458
      %v1749 = vpop.f32.mrb[0].mxu0
      %v1750 = vadd.f32 %v1489, %v1749
      %v1751 = vpop.f32.mrb[0].mxu0
      %v1752 = vpop.f32.mrb[0].mxu0
      %v1753 = vadd.f32 %v1489, %v1752
      %v1754 = vpop.f32.mrb[0].mxu0
      %1755 = vmatprep.mubr.bf16.mxu0 0
      %1756 = vmatmul.mubr.bf16.gmra.mrb[0].mxu0 %v1459
      %v1757 = vpop.f32.mrb[0].mxu0
      %v1758 = vadd.f32 %v1489, %v1757
      %v1759 = vpop.f32.mrb[0].mxu0
      %v1760 = vpop.f32.mrb[0].mxu0
      %v1761 = vadd.f32 %v1489, %v1760
      %v1762 = vpop.f32.mrb[0].mxu0
      %1763 = vmatprep.mubr.bf16.mxu0 0
      %1764 = vmatmul.mubr.bf16.gmra.mrb[0].mxu0 %v1460
      %v1765 = vpop.f32.mrb[0].mxu0
      %v1766 = vadd.f32 %v1489, %v1765
      %v1767 = vpop.f32.mrb[0].mxu0
      %v1768 = vpop.f32.mrb[0].mxu0
      %v1769 = vadd.f32 %v1489, %v1768
      %v1770 = vpop.f32.mrb[0].mxu0
      %1771 = vmatprep.mubr.bf16.mxu0 0
      %1772 = vmatmul.mubr.bf16.gmra.mrb[0].mxu0 %v1461
      %v1773 = vpop.f32.mrb[0].mxu0
      %v1774 = vadd.f32 %v1489, %v1773
      %v1775 = vpop.f32.mrb[0].mxu0
      %v1776 = vpop.f32.mrb[0].mxu0
      %v1777 = vadd.f32 %v1489, %v1776
      %v1778 = vpop.f32.mrb[0].mxu0
      %1779 = vmatprep.mubr.bf16.mxu0 0
      %1780 = vmatmul.mubr.bf16.gmra.mrb[0].mxu0 %v1462
      %v1781 = vpop.f32.mrb[0].mxu0
      %v1782 = vadd.f32 %v1489, %v1781
      %v1783 = vpop.f32.mrb[0].mxu0
      %v1784 = vpop.f32.mrb[0].mxu0
      %v1785 = vadd.f32 %v1489, %v1784
      %v1786 = vpop.f32.mrb[0].mxu0
      %1787 = vmatprep.mubr.bf16.mxu0 0
      %1788 = vmatmul.mubr.bf16.gmra.mrb[0].mxu0 %v1463
      %v1789 = vpop.f32.mrb[0].mxu0
      %v1790 = vadd.f32 %v1489, %v1789
      %v1791 = vpop.f32.mrb[0].mxu0
      %v1792 = vpop.f32.mrb[0].mxu0
      %v1793 = vadd.f32 %v1489, %v1792
      %v1794 = vpop.f32.mrb[0].mxu0
      %1795 = vmatprep.mubr.bf16.mxu0 0
      %1796 = vmatmul.mubr.bf16.gmra.mrb[0].mxu0 %v1464
      %v1797 = vpop.f32.mrb[0].mxu0
      %v1798 = vadd.f32 %v1489, %v1797
      %v1799 = vpop.f32.mrb[0].mxu0
      %v1800 = vpop.f32.mrb[0].mxu0
      %v1801 = vadd.f32 %v1489, %v1800
      %v1802 = vpop.f32.mrb[0].mxu0
      %1803 = vmatprep.mubr.bf16.mxu0 0
      %1804 = vmatmul.mubr.bf16.gmra.mrb[0].mxu0 %v1465
      %v1805 = vpop.f32.mrb[0].mxu0
      %v1806 = vadd.f32 %v1489, %v1805
      %v1807 = vpop.f32.mrb[0].mxu0
      %v1808 = vpop.f32.mrb[0].mxu0
      %v1809 = vadd.f32 %v1489, %v1808
      %v1810 = vpop.f32.mrb[0].mxu0
      %1811 = vmatprep.mubr.bf16.mxu0 0
      %1812 = vmatmul.mubr.bf16.gmra.mrb[0].mxu0 %v1466
      %v1813 = vpop.f32.mrb[0].mxu0
      %v1814 = vadd.f32 %v1489, %v1813
      %v1815 = vpop.f32.mrb[0].mxu0
      %v1816 = vpop.f32.mrb[0].mxu0
      %v1817 = vadd.f32 %v1489, %v1816
      %v1818 = vpop.f32.mrb[0].mxu0
      %1819 = vmatprep.mubr.bf16.mxu0 0
      %1820 = vmatmul.mubr.bf16.gmra.mrb[0].mxu0 %v1467
      %v1821 = vpop.f32.mrb[0].mxu0
      %v1822 = vadd.f32 %v1489, %v1821
      %v1823 = vpop.f32.mrb[0].mxu0
      %v1824 = vpop.f32.mrb[0].mxu0
      %v1825 = vadd.f32 %v1489, %v1824
      %v1826 = vpop.f32.mrb[0].mxu0
      %1827 = vdwg.mxu0
      %1828 = vst [vmem:[%s280] sm:$0xff] %v1574
      %1829 = vst [vmem:[%s280 + $0x8] sm:$0xff] %v1577
      %1830 = vst [vmem:[%s280 + $0x10] sm:$0xff] %v1582
      %1831 = vst [vmem:[%s280 + $0x18] sm:$0xff] %v1585
      %1832 = vst [vmem:[%s280 + $0x20] sm:$0xff] %v1590
      %1833 = vst [vmem:[%s280 + $0x28] sm:$0xff] %v1593
      %1834 = vst [vmem:[%s280 + $0x30] sm:$0xff] %v1598
      %1835 = vst [vmem:[%s280 + $0x38] sm:$0xff] %v1601
      %1836 = vst [vmem:[%s280 + $0x40] sm:$0xff] %v1606
      %1837 = vst [vmem:[%s280 + $0x48] sm:$0xff] %v1609
      %1838 = vst [vmem:[%s280 + $0x50] sm:$0xff] %v1614
      %1839 = vst [vmem:[%s280 + $0x58] sm:$0xff] %v1617
      %1840 = vst [vmem:[%s280 + $0x60] sm:$0xff] %v1622
      %1841 = vst [vmem:[%s280 + $0x68] sm:$0xff] %v1625
      %1842 = vst [vmem:[%s280 + $0x70] sm:$0xff] %v1630
      %1843 = vst [vmem:[%s280 + $0x78] sm:$0xff] %v1633
      %1844 = vst [vmem:[%s280 + $0x80] sm:$0xff] %v1638
      %1845 = vst [vmem:[%s280 + $0x88] sm:$0xff] %v1641
      %1846 = vst [vmem:[%s280 + $0x90] sm:$0xff] %v1646
      %1847 = vst [vmem:[%s280 + $0x98] sm:$0xff] %v1649
      %1848 = vst [vmem:[%s280 + $0xa0] sm:$0xff] %v1654
      %1849 = vst [vmem:[%s280 + $0xa8] sm:$0xff] %v1657
      %1850 = vst [vmem:[%s280 + $0xb0] sm:$0xff] %v1662
      %1851 = vst [vmem:[%s280 + $0xb8] sm:$0xff] %v1665
      %1852 = vst [vmem:[%s280 + $0xc0] sm:$0xff] %v1670
      %1853 = vst [vmem:[%s280 + $0xc8] sm:$0xff] %v1673
      %1854 = vst [vmem:[%s280 + $0xd0] sm:$0xff] %v1678
      %1855 = vst [vmem:[%s280 + $0xd8] sm:$0xff] %v1681
      %1856 = vst [vmem:[%s280 + $0xe0] sm:$0xff] %v1686
      %1857 = vst [vmem:[%s280 + $0xe8] sm:$0xff] %v1689
      %1858 = vst [vmem:[%s280 + $0xf0] sm:$0xff] %v1694
      %1859 = vst [vmem:[%s280 + $0xf8] sm:$0xff] %v1697
      %1860 = vst [vmem:[%s280 + $0x100] sm:$0xff] %v1702
      %1861 = vst [vmem:[%s280 + $0x108] sm:$0xff] %v1705
      %1862 = vst [vmem:[%s280 + $0x110] sm:$0xff] %v1710
      %1863 = vst [vmem:[%s280 + $0x118] sm:$0xff] %v1713
      %1864 = vst [vmem:[%s280 + $0x120] sm:$0xff] %v1718
      %1865 = vst [vmem:[%s280 + $0x128] sm:$0xff] %v1721
      %1866 = vst [vmem:[%s280 + $0x130] sm:$0xff] %v1726
      %1867 = vst [vmem:[%s280 + $0x138] sm:$0xff] %v1729
      %1868 = vst [vmem:[%s280 + $0x140] sm:$0xff] %v1734
      %1869 = vst [vmem:[%s280 + $0x148] sm:$0xff] %v1737
      %1870 = vst [vmem:[%s280 + $0x150] sm:$0xff] %v1742
      %1871 = vst [vmem:[%s280 + $0x158] sm:$0xff] %v1745
      %1872 = vst [vmem:[%s280 + $0x160] sm:$0xff] %v1750
      %1873 = vst [vmem:[%s280 + $0x168] sm:$0xff] %v1753
      %1874 = vst [vmem:[%s280 + $0x170] sm:$0xff] %v1758
      %1875 = vst [vmem:[%s280 + $0x178] sm:$0xff] %v1761
      %1876 = vst [vmem:[%s280 + $0x180] sm:$0xff] %v1766
      %1877 = vst [vmem:[%s280 + $0x188] sm:$0xff] %v1769
      %1878 = vst [vmem:[%s280 + $0x190] sm:$0xff] %v1774
      %1879 = vst [vmem:[%s280 + $0x198] sm:$0xff] %v1777
      %1880 = vst [vmem:[%s280 + $0x1a0] sm:$0xff] %v1782
      %1881 = vst [vmem:[%s280 + $0x1a8] sm:$0xff] %v1785
      %1882 = vst [vmem:[%s280 + $0x1b0] sm:$0xff] %v1790
      %1883 = vst [vmem:[%s280 + $0x1b8] sm:$0xff] %v1793
      %1884 = vst [vmem:[%s280 + $0x1c0] sm:$0xff] %v1798
      %1885 = vst [vmem:[%s280 + $0x1c8] sm:$0xff] %v1801
      %1886 = vst [vmem:[%s280 + $0x1d0] sm:$0xff] %v1806
      %1887 = vst [vmem:[%s280 + $0x1d8] sm:$0xff] %v1809
      %1888 = vst [vmem:[%s280 + $0x1e0] sm:$0xff] %v1814
      %1889 = vst [vmem:[%s280 + $0x1e8] sm:$0xff] %v1817
      %1890 = vst [vmem:[%s280 + $0x1f0] sm:$0xff] %v1822
      %1891 = vst [vmem:[%s280 + $0x1f8] sm:$0xff] %v1825
      %s1892 = smul.u32 64, %s18
      %p1893 = scmp.lt.s32.totalorder %s1892, 127
      %s1894 = scalar_select %p1893, %s1892, 127
      %s1895 = smul.addr %s1894, 8
      %s1896 = scalar_lea.vmem %s7, %s1895
      // Predicated region
      $region49: #{property_predictor_forward.1} parent=47 // pred_check
        %p1897 = pneg %p188
      $region50: #{property_predictor_forward.1} parent=47 // pred_check_branch
        %1899 = sbr.rel (%p1897) target = $region52
      $region51: #{property_predictor_forward.1} parent=47 // pred_region
        %s1900 = smul.u32 64, %s18
      $region52: #{property_predictor_forward.1} parent=47 // pred_fallthru
        _
    $region48: #{property_predictor_forward.1} parent=5 // pred_fallthru
      _
    %p1901 = scmp.le.s32.totalorder 2, %s13
    // Predicated region
    $region53: #{property_predictor_forward.1} parent=5 // pred_check
      %p1902 = pneg %p1901
    $region54: #{property_predictor_forward.1} parent=5 // pred_check_branch
      %1904 = sbr.rel (%p1902) target = $region56
    $region55: #{property_predictor_forward.1} parent=5 // pred_region
      %s1905 = ssub.s32 %s13, 2
      // Predicated region
      $region57: #{property_predictor_forward.1} parent=55 // pred_check
        %p1906 = pneg %p194
      $region58: #{property_predictor_forward.1} parent=55 // pred_check_branch
        %1908 = sbr.rel (%p1906) target = $region60
      $region59: #{property_predictor_forward.1} parent=55 // pred_region
        %s1909 = smul.u32 64, %s19
        %p1910 = scmp.lt.s32.totalorder %s1909, 127
        %s1911 = scalar_select %p1910, %s1909, 127
        %s1912 = smul.addr %s1911, 8
        %s1913 = scalar_lea.vmem %s7, %s1912
      $region60: #{property_predictor_forward.1} parent=55 // pred_fallthru
        _
    $region56: #{property_predictor_forward.1} parent=5 // pred_fallthru
      _
  $region6: #{property_predictor_forward.1} parent=0 // loop_footer
    %s17 = sadd.s32 1, %s13
  $region7: #{property_predictor_forward.1} parent=0 // loop_footer_branch
    %12 = sbr.rel target = $region3
  $region8: #{property_predictor_forward.1} parent=0 // loop_exit
    _

</llo_original>
